<compile_context>
chip_gen: v7x
topology: tpu7x:2x2x1
jax: 0.10.0
libtpu: 0.0.40
codegen_flags: <defaults>
</compile_context>

<pallas_src>
import functools

import jax
import jax.numpy as jnp
from jax.experimental import pallas as pl
from jax.experimental.pallas import tpu as pltpu


def _round_up(x, m):
    return ((x + m - 1) // m) * m


def mas_interface_kernel(h_ref, w_ref, b_ref, att3_ref, mem_ref,
                         read_ref, att_ref, gs_ref, *, shift_size):
    """One grid step: a block of BB batch rows, fully resident in VMEM."""
    S = shift_size
    BB, A = att_ref.shape

    # ---- hidden -> read params: one [BB, H] @ [H, P] MXU matmul per block ----
    h = h_ref[...].astype(jnp.float32)                        # [BB, H]
    w = w_ref[...].astype(jnp.float32)                        # [H, P]
    params = jnp.dot(h, w, preferred_element_type=jnp.float32)
    params = params + b_ref[...].astype(jnp.float32)          # [BB, P]

    # ---- split + nonlinearities (gate: 3, shift: S, gamma: 1) ----
    gate = jax.nn.sigmoid(params[:, 0:3])                     # [BB, 3]
    shift = jax.nn.softmax(params[:, 3:3 + S], axis=-1)       # [BB, S]
    gamma = jax.nn.softplus(params[:, 3 + S:4 + S]) + 1.0     # [BB, 1]

    # ---- unpack the three attention planes (packed along lanes) ----
    att3 = att3_ref[...].astype(jnp.float32)                  # [BB, 3A]
    prev_att = att3[:, 0:A]
    fenc = att3[:, A:2 * A]
    zha = att3[:, 2 * A:3 * A]

    # ---- circular convolution (cross-correlation with the soft shift kernel) ----
    # shifted[b, a] = sum_s shift[b, s] * prev_att[b, (a + s - S//2) % A]
    # S is tiny & static -> unrolled.  The rolls are static lane rotations done
    # with slice+concat: a handful of vreg ops per block, far off the HBM-bound
    # critical path.  (pltpu.roll(axis=-1) is a drop-in XLU alternative.)
    shifted = jnp.zeros_like(prev_att)
    for s in range(S):
        k = (S // 2 - s) % A                                  # == jnp.roll(prev_att, S//2 - s)
        if k == 0:
            rolled = prev_att
        else:
            rolled = jnp.concatenate(
                [prev_att[:, A - k:], prev_att[:, :A - k]], axis=-1)
        shifted = shifted + shift[:, s:s + 1] * rolled

    # ---- sharpening: pow(x + 1e-12, gamma), then L1 normalize over A ----
    powed = jnp.power(shifted + 1e-12, gamma)
    norm = jnp.sum(jnp.abs(powed), axis=-1, keepdims=True)
    sharp = powed / jnp.maximum(norm, 1e-12)

    # ---- gating with the final-encoder / zero-hard attention ----
    att_new = (gate[:, 0:1] * sharp
               + gate[:, 1:2] * fenc
               + gate[:, 2:3] * zha)                          # [BB, A]

    att_ref[...] = att_new.astype(att_ref.dtype)
    gs_ref[...] = jnp.concatenate([gate, shift], axis=-1).astype(gs_ref.dtype)

    # ---- memory read: read[b, :] = sum_a att_new[b, a] * mem[b, a, :] --------
    # VPU broadcast-multiply + sublane reduction per batch row (memory block
    # keeps A on sublanes / C on lanes), rather than BB serialised M=1 MXU dots.
    att_t = att_new.T                                         # [A, BB]
    for b in range(BB):
        w_col = att_t[:, b:b + 1]                             # [A, 1]
        m_row = mem_ref[b].astype(jnp.float32)                # [A, C]  (bf16 stream -> f32)
        row = jnp.sum(w_col * m_row, axis=0, keepdims=True)   # [1, C]
        read_ref[b:b + 1, :] = row.astype(read_ref.dtype)


def mas_interface_forward(ctrl_hidden_BxH, prev_memory_BxAxC,
                          prev_attention_BxAx1, final_encoder_attention_BxAx1,
                          zero_hard_attention_BxAx1, weight_HxP, bias_P,
                          *, shift_size=3, block_batch=128,
                          memory_dtype=jnp.bfloat16):
    """MASInterface.forward.

    `weight_HxP` is the torch Linear weight pre-transposed ONCE to [H, P]
    (y = h @ W_HxP + b), so no per-call transpose is paid (perf-review item).
    """
    B, H = ctrl_hidden_BxH.shape
    _, A, C = prev_memory_BxAxC.shape
    S = shift_size
    P = 3 + S + 1

    # Batch blocking: BB rows per grid step (multiple of 8 sublanes).
    bb = max(8, min(_round_up(block_batch, 8), _round_up(B, 8)))
    B_pad = _round_up(B, bb)
    grid = (pl.cdiv(B_pad, bb),)

    bias_1xP = bias_P.reshape(1, P).astype(jnp.float32)

    # Pack the three attention planes along lanes: [B, 3A] -> one input DMA.
    att3 = jnp.concatenate(
        [prev_attention_BxAx1[..., 0],
         final_encoder_attention_BxAx1[..., 0],
         zero_hard_attention_BxAx1[..., 0]], axis=-1).astype(jnp.float32)

    # bf16 memory stream (kernel upcasts): halves HBM bytes of the dominant input.
    mem_in = prev_memory_BxAxC.astype(memory_dtype)

    h_in = ctrl_hidden_BxH.astype(jnp.float32)
    pad = B_pad - B
    if pad:
        h_in = jnp.pad(h_in, ((0, pad), (0, 0)))
        att3 = jnp.pad(att3, ((0, pad), (0, 0)))
        mem_in = jnp.pad(mem_in, ((0, pad), (0, 0), (0, 0)))

    kernel = functools.partial(mas_interface_kernel, shift_size=S)

    out_shapes = (
        jax.ShapeDtypeStruct((B_pad, C), jnp.float32),        # read vector
        jax.ShapeDtypeStruct((B_pad, A), jnp.float32),        # updated attention
        jax.ShapeDtypeStruct((B_pad, 3 + S), jnp.float32),    # gate | shift (post-activation)
    )

    # Raise the scoped-VMEM limit only if the double-buffered blocks need it
    # (relevant when block_batch is pushed to 128/256 with large A*C).
    itemsize = jnp.dtype(memory_dtype).itemsize
    vmem_need = 2 * bb * (A * C * itemsize + (4 * A + C + P + 8) * 4) + (4 << 20)
    cp_kwargs = dict(dimension_semantics=("parallel",))
    if vmem_need > (32 << 20):
        cp_kwargs["vmem_limit_bytes"] = int(min(vmem_need, 64 << 20))  # v7x-safe cap

    read_BxC, att_BxA, gs = pl.pallas_call(
        kernel,
        out_shape=out_shapes,
        grid_spec=pltpu.PrefetchScalarGridSpec(
            num_scalar_prefetch=0,
            grid=grid,
            in_specs=[
                pl.BlockSpec((bb, H), lambda i: (i, 0)),            # hidden
                pl.BlockSpec((H, P), lambda i: (0, 0)),             # weight (shared)
                pl.BlockSpec((1, P), lambda i: (0, 0)),             # bias (shared)
                pl.BlockSpec((bb, 3 * A), lambda i: (i, 0)),        # packed attentions
                pl.BlockSpec((bb, A, C), lambda i: (i, 0, 0)),      # memory (bf16 stream)
            ],
            out_specs=[
                pl.BlockSpec((bb, C), lambda i: (i, 0)),
                pl.BlockSpec((bb, A), lambda i: (i, 0)),
                pl.BlockSpec((bb, 3 + S), lambda i: (i, 0)),
            ],
        ),
        compiler_params=pltpu.CompilerParams(**cp_kwargs),
    )(h_in, weight_HxP.astype(jnp.float32), bias_1xP, att3, mem_in)

    read_BxC = read_BxC[:B]
    att_BxA = att_BxA[:B]
    gate_Bx3 = gs[:B, 0:3]
    shift_BxS = gs[:B, 3:3 + S]

    new_state = {
        "attention": att_BxA[..., None],                           # [B, A, 1]
        "final_encoder_attention": final_encoder_attention_BxAx1,  # [B, A, 1]
        "gate": gate_Bx3[..., None],                               # [B, 3, 1]
        "shift": shift_BxS[..., None],                             # [B, S, 1]
    }
    return read_BxC, prev_memory_BxAxC, new_state


def reference_forward(h, mem, prev_att, fenc, zha, W_PxH, b_P, S):
    """Pure-JAX reference reproducing the PyTorch forward pass."""
    params = h @ W_PxH.T + b_P
    gate = jax.nn.sigmoid(params[:, 0:3])
    shift = jax.nn.softmax(params[:, 3:3 + S], axis=-1)
    gamma = jax.nn.softplus(params[:, 3 + S:4 + S]) + 1.0
    att = prev_att[..., 0]
    shifted = jnp.zeros_like(att)
    for s in range(S):
        shifted = shifted + shift[:, s:s + 1] * jnp.roll(att, S // 2 - s, axis=1)
    powed = jnp.power(shifted + 1e-12, gamma)
    norm = jnp.sum(jnp.abs(powed), axis=1, keepdims=True)
    sharp = powed / jnp.maximum(norm, 1e-12)
    att_new = (gate[:, 0:1] * sharp + gate[:, 1:2] * fenc[..., 0]
               + gate[:, 2:3] * zha[..., 0])
    # Exact f32 read (mirrors the kernel's VPU mul+reduce; no matmul-precision ambiguity).
    read = jnp.sum(att_new[:, :, None] * mem, axis=1)
    return read, att_new, gate, shift


if __name__ == "__main__":
    B, H, A, C, S = 16, 32, 128, 256, 3
    P = 3 + S + 1
    BLOCK_BATCH = 8   # small for the demo (-> 2 grid steps); use 128-256 at real batch sizes

    key = jax.random.PRNGKey(0)
    k1, k2, k3, k4, k5 = jax.random.split(key, 5)

    # Deterministic parameters (PyTorch Linear layout: [P, H] weight, [P] bias).
    bound = 1.0 / jnp.sqrt(H)
    weight_PxH = jax.random.uniform(k1, (P, H), jnp.float32, -bound, bound)
    bias_P = jax.random.uniform(k2, (P,), jnp.float32, -bound, bound)
    weight_HxP = jnp.transpose(weight_PxH)   # hoisted once, outside the forward path

    # Inputs.
    ctrl_hidden = jax.random.normal(k3, (B, H), jnp.float32)
    prev_memory = jax.random.normal(k4, (B, A, C), jnp.float32)

    # init_state()-style attention tensors.
    zero_hard_att = jnp.zeros((B, A, 1), jnp.float32).at[:, 0, 0].set(1.0)
    prev_attention = zero_hard_att
    final_enc_att = jax.nn.softmax(jax.random.normal(k5, (B, A)), axis=1)[..., None]

    forward = jax.jit(functools.partial(
        mas_interface_forward, shift_size=S, block_batch=BLOCK_BATCH,
        memory_dtype=jnp.bfloat16))

    read_vec, memory_out, state = forward(
        ctrl_hidden, prev_memory, prev_attention, final_enc_att,
        zero_hard_att, weight_HxP, bias_P)
    jax.block_until_ready((read_vec, memory_out, state))

    # Reference using the same bf16-quantized memory stream (tight comparison),
    # plus a loose comparison against the full-f32 memory reference.
    mem_q = prev_memory.astype(jnp.bfloat16).astype(jnp.float32)
    ref_read_q, ref_att, ref_gate, ref_shift = reference_forward(
        ctrl_hidden, mem_q, prev_attention, final_enc_att, zero_hard_att,
        weight_PxH, bias_P, S)
    ref_read_f32, _, _, _ = reference_forward(
        ctrl_hidden, prev_memory, prev_attention, final_enc_att, zero_hard_att,
        weight_PxH, bias_P, S)

    assert jnp.allclose(state["attention"][..., 0], ref_att, rtol=2e-3, atol=2e-4)
    assert jnp.allclose(state["gate"][..., 0], ref_gate, rtol=2e-3, atol=2e-4)
    assert jnp.allclose(state["shift"][..., 0], ref_shift, rtol=2e-3, atol=2e-4)
    assert jnp.allclose(read_vec, ref_read_q, rtol=1e-2, atol=2e-3)
    assert jnp.allclose(read_vec, ref_read_f32, rtol=5e-2, atol=5e-2)
    assert jnp.array_equal(memory_out, prev_memory)

    print("KERNEL_OK")
</pallas_src>

<mosaic_0001>
module attributes {stable_mosaic.version = 11 : i64} {
  func.func @mas_interface_kernel(%arg0: i32, %arg1: memref<8x32xf32, #tpu.memory_space<vmem>>, %arg2: memref<32x7xf32, #tpu.memory_space<vmem>>, %arg3: memref<1x7xf32, #tpu.memory_space<vmem>>, %arg4: memref<8x384xf32, #tpu.memory_space<vmem>>, %arg5: memref<8x128x256xbf16, #tpu.memory_space<vmem>>, %arg6: memref<8x256xf32, #tpu.memory_space<vmem>>, %arg7: memref<8x128xf32, #tpu.memory_space<vmem>>, %arg8: memref<8x6xf32, #tpu.memory_space<vmem>>) attributes {dimension_semantics = [#tpu.dimension_semantics<parallel>], iteration_bounds = array<i64: 2>, scalar_prefetch = 0 : i64, scratch_operands = 0 : i64, tpu.core_type = #tpu.core_type<tc>, window_params = [{transform_indices = @transform_0, window_bounds = array<i64: 8, 32>}, {pipeline_mode = #tpu.pipeline_mode<synchronous>, transform_indices = @transform_1, window_bounds = array<i64: 32, 7>}, {pipeline_mode = #tpu.pipeline_mode<synchronous>, transform_indices = @transform_2, window_bounds = array<i64: 1, 7>}, {transform_indices = @transform_3, window_bounds = array<i64: 8, 384>}, {transform_indices = @transform_4, window_bounds = array<i64: 8, 128, 256>}, {transform_indices = @transform_5, window_bounds = array<i64: 8, 256>}, {transform_indices = @transform_6, window_bounds = array<i64: 8, 128>}, {transform_indices = @transform_7, window_bounds = array<i64: 8, 6>}]} {
    %c0 = arith.constant 0 : index
    %c0_0 = arith.constant 0 : index
    %0 = vector.load %arg1[%c0, %c0_0] : memref<8x32xf32, #tpu.memory_space<vmem>>, vector<8x32xf32>
    %c0_1 = arith.constant 0 : index
    %c0_2 = arith.constant 0 : index
    %1 = vector.load %arg2[%c0_1, %c0_2] : memref<32x7xf32, #tpu.memory_space<vmem>>, vector<32x7xf32>
    %cst = arith.constant dense<0.000000e+00> : vector<8x7xf32>
    %2 = tpu.matmul %0, %1, %cst {dimension_numbers = #tpu.dot_dimension_numbers<[1], [0], [0], [1], [0, 0, 1, 1], [], []>} : vector<8x32xf32>, vector<32x7xf32>, vector<8x7xf32> -> vector<8x7xf32>
    %c0_3 = arith.constant 0 : index
    %c0_4 = arith.constant 0 : index
    %3 = vector.load %arg3[%c0_3, %c0_4] : memref<1x7xf32, #tpu.memory_space<vmem>>, vector<1x7xf32>
    %4 = vector.broadcast %3 : vector<1x7xf32> to vector<8x7xf32>
    %5 = arith.addf %2, %4 : vector<8x7xf32>
    %6 = vector.extract_strided_slice %5 {offsets = [0, 0], sizes = [8, 3], strides = [1, 1]} : vector<8x7xf32> to vector<8x3xf32>
    %7 = arith.negf %6 : vector<8x3xf32>
    %8 = math.exp %7 : vector<8x3xf32>
    %cst_5 = arith.constant 1.000000e+00 : f32
    %9 = vector.broadcast %cst_5 : f32 to vector<8x3xf32>
    %10 = arith.addf %9, %8 : vector<8x3xf32>
    %11 = arith.divf %9, %10 : vector<8x3xf32>
    %12 = vector.extract_strided_slice %5 {offsets = [0, 3], sizes = [8, 3], strides = [1, 1]} : vector<8x7xf32> to vector<8x3xf32>
    %cst_6 = arith.constant dense<0xFF800000> : vector<8xf32>
    %13 = vector.multi_reduction <maximumf>, %12, %cst_6 [1] : vector<8x3xf32> to vector<8xf32>
    %cst_7 = arith.constant 0xFF800000 : f32
    %14 = vector.broadcast %cst_7 : f32 to vector<8xf32>
    %15 = arith.maximumf %14, %13 : vector<8xf32>
    %16 = vector.shape_cast %15 : vector<8xf32> to vector<8x1xf32>
    %17 = vector.broadcast %16 : vector<8x1xf32> to vector<8x3xf32>
    %18 = arith.subf %12, %17 : vector<8x3xf32>
    %19 = math.exp %18 : vector<8x3xf32>
    %cst_8 = arith.constant dense<0.000000e+00> : vector<8xf32>
    %20 = vector.multi_reduction <add>, %19, %cst_8 [1] : vector<8x3xf32> to vector<8xf32>
    %21 = vector.shape_cast %20 : vector<8xf32> to vector<8x1xf32>
    %22 = vector.broadcast %21 : vector<8x1xf32> to vector<8x3xf32>
    %23 = arith.divf %19, %22 : vector<8x3xf32>
    %24 = vector.extract_strided_slice %5 {offsets = [0, 6], sizes = [8, 1], strides = [1, 1]} : vector<8x7xf32> to vector<8x1xf32>
    %cst_9 = arith.constant 0.000000e+00 : f32
    %25 = vector.broadcast %cst_9 : f32 to vector<8x1xf32>
    %26 = arith.maximumf %24, %25 : vector<8x1xf32>
    %27 = vector.broadcast %cst_9 : f32 to vector<8x1xf32>
    %28 = arith.subf %24, %27 : vector<8x1xf32>
    %29 = arith.cmpf one, %28, %28 : vector<8x1xf32>
    %30 = vector.broadcast %cst_9 : f32 to vector<8x1xf32>
    %31 = arith.addf %24, %30 : vector<8x1xf32>
    %32 = math.absf %28 : vector<8x1xf32>
    %cst_10 = arith.constant 0.000000e+00 : f32
    %33 = vector.broadcast %cst_10 : f32 to vector<8x1xf32>
    %34 = arith.subf %33, %32 : vector<8x1xf32>
    %35 = math.exp %34 : vector<8x1xf32>
    %36 = math.log1p %35 : vector<8x1xf32>
    %37 = arith.addf %26, %36 : vector<8x1xf32>
    %38 = arith.select %29, %31, %37 : vector<8x1xi1>, vector<8x1xf32>
    %cst_11 = arith.constant 1.000000e+00 : f32
    %39 = vector.broadcast %cst_11 : f32 to vector<8x1xf32>
    %40 = arith.addf %38, %39 : vector<8x1xf32>
    %c0_12 = arith.constant 0 : index
    %c0_13 = arith.constant 0 : index
    %41 = vector.load %arg4[%c0_12, %c0_13] : memref<8x384xf32, #tpu.memory_space<vmem>>, vector<8x384xf32>
    %42 = vector.extract_strided_slice %41 {offsets = [0, 0], sizes = [8, 128], strides = [1, 1]} : vector<8x384xf32> to vector<8x128xf32>
    %43 = vector.extract_strided_slice %41 {offsets = [0, 128], sizes = [8, 128], strides = [1, 1]} : vector<8x384xf32> to vector<8x128xf32>
    %44 = vector.extract_strided_slice %41 {offsets = [0, 256], sizes = [8, 128], strides = [1, 1]} : vector<8x384xf32> to vector<8x128xf32>
    %cst_14 = arith.constant 0.000000e+00 : f32
    %45 = vector.broadcast %cst_14 : f32 to vector<8x128xf32>
    %46 = vector.extract_strided_slice %42 {offsets = [0, 127], sizes = [8, 1], strides = [1, 1]} : vector<8x128xf32> to vector<8x1xf32>
    %47 = vector.extract_strided_slice %42 {offsets = [0, 0], sizes = [8, 127], strides = [1, 1]} : vector<8x128xf32> to vector<8x127xf32>
    %48 = tpu.concatenate %46, %47 in 1 : vector<8x1xf32>, vector<8x127xf32> -> vector<8x128xf32>
    %49 = vector.extract_strided_slice %23 {offsets = [0, 0], sizes = [8, 1], strides = [1, 1]} : vector<8x3xf32> to vector<8x1xf32>
    %50 = vector.broadcast %49 : vector<8x1xf32> to vector<8x128xf32>
    %51 = arith.mulf %50, %48 : vector<8x128xf32>
    %52 = arith.addf %45, %51 : vector<8x128xf32>
    %53 = vector.extract_strided_slice %23 {offsets = [0, 1], sizes = [8, 1], strides = [1, 1]} : vector<8x3xf32> to vector<8x1xf32>
    %54 = vector.broadcast %53 : vector<8x1xf32> to vector<8x128xf32>
    %55 = arith.mulf %54, %42 : vector<8x128xf32>
    %56 = arith.addf %52, %55 : vector<8x128xf32>
    %57 = vector.extract_strided_slice %42 {offsets = [0, 1], sizes = [8, 127], strides = [1, 1]} : vector<8x128xf32> to vector<8x127xf32>
    %58 = vector.extract_strided_slice %42 {offsets = [0, 0], sizes = [8, 1], strides = [1, 1]} : vector<8x128xf32> to vector<8x1xf32>
    %59 = tpu.concatenate %57, %58 in 1 : vector<8x127xf32>, vector<8x1xf32> -> vector<8x128xf32>
    %60 = vector.extract_strided_slice %23 {offsets = [0, 2], sizes = [8, 1], strides = [1, 1]} : vector<8x3xf32> to vector<8x1xf32>
    %61 = vector.broadcast %60 : vector<8x1xf32> to vector<8x128xf32>
    %62 = arith.mulf %61, %59 : vector<8x128xf32>
    %63 = arith.addf %56, %62 : vector<8x128xf32>
    %cst_15 = arith.constant 9.99999996E-13 : f32
    %64 = vector.broadcast %cst_15 : f32 to vector<8x128xf32>
    %65 = arith.addf %63, %64 : vector<8x128xf32>
    %66 = vector.broadcast %40 : vector<8x1xf32> to vector<8x128xf32>
    %67 = math.powf %65, %66 : vector<8x128xf32>
    %68 = math.absf %67 : vector<8x128xf32>
    %cst_16 = arith.constant dense<0.000000e+00> : vector<8xf32>
    %69 = vector.multi_reduction <add>, %68, %cst_16 [1] : vector<8x128xf32> to vector<8xf32>
    %70 = vector.shape_cast %69 : vector<8xf32> to vector<8x1xf32>
    %cst_17 = arith.constant 9.99999996E-13 : f32
    %71 = vector.broadcast %cst_17 : f32 to vector<8x1xf32>
    %72 = arith.maximumf %70, %71 : vector<8x1xf32>
    %73 = vector.broadcast %72 : vector<8x1xf32> to vector<8x128xf32>
    %74 = arith.divf %67, %73 : vector<8x128xf32>
    %75 = vector.extract_strided_slice %11 {offsets = [0, 0], sizes = [8, 1], strides = [1, 1]} : vector<8x3xf32> to vector<8x1xf32>
    %76 = vector.broadcast %75 : vector<8x1xf32> to vector<8x128xf32>
    %77 = arith.mulf %76, %74 : vector<8x128xf32>
    %78 = vector.extract_strided_slice %11 {offsets = [0, 1], sizes = [8, 1], strides = [1, 1]} : vector<8x3xf32> to vector<8x1xf32>
    %79 = vector.broadcast %78 : vector<8x1xf32> to vector<8x128xf32>
    %80 = arith.mulf %79, %43 : vector<8x128xf32>
    %81 = arith.addf %77, %80 : vector<8x128xf32>
    %82 = vector.extract_strided_slice %11 {offsets = [0, 2], sizes = [8, 1], strides = [1, 1]} : vector<8x3xf32> to vector<8x1xf32>
    %83 = vector.broadcast %82 : vector<8x1xf32> to vector<8x128xf32>
    %84 = arith.mulf %83, %44 : vector<8x128xf32>
    %85 = arith.addf %81, %84 : vector<8x128xf32>
    %c0_18 = arith.constant 0 : index
    %c0_19 = arith.constant 0 : index
    %86 = vector.load %arg7[%c0_18, %c0_19] : memref<8x128xf32, #tpu.memory_space<vmem>>, vector<8x128xf32>
    tpu.vector_store %arg7[%c0_18, %c0_19], %85 {strides = array<i32>} : memref<8x128xf32, #tpu.memory_space<vmem>>, vector<8x128xf32>,
    %87 = tpu.concatenate %11, %23 in 1 : vector<8x3xf32>, vector<8x3xf32> -> vector<8x6xf32>
    %c0_20 = arith.constant 0 : index
    %c0_21 = arith.constant 0 : index
    %88 = vector.load %arg8[%c0_20, %c0_21] : memref<8x6xf32, #tpu.memory_space<vmem>>, vector<8x6xf32>
    tpu.vector_store %arg8[%c0_20, %c0_21], %87 {strides = array<i32>} : memref<8x6xf32, #tpu.memory_space<vmem>>, vector<8x6xf32>,
    %89 = tpu.transpose %85, [1, 0] : vector<8x128xf32> -> vector<128x8xf32>
    %90 = vector.extract_strided_slice %89 {offsets = [0, 0], sizes = [128, 1], strides = [1, 1]} : vector<128x8xf32> to vector<128x1xf32>
    %c0_22 = arith.constant 0 : index
    %c0_23 = arith.constant 0 : index
    %c0_24 = arith.constant 0 : index
    %91 = vector.load %arg5[%c0_22, %c0_23, %c0_24] : memref<8x128x256xbf16, #tpu.memory_space<vmem>>, vector<1x128x256xbf16>
    %92 = vector.shape_cast %91 : vector<1x128x256xbf16> to vector<128x256xbf16>
    %93 = arith.extf %92 : vector<128x256xbf16> to vector<128x256xf32>
    %94 = vector.broadcast %90 : vector<128x1xf32> to vector<128x256xf32>
    %95 = arith.mulf %94, %93 : vector<128x256xf32>
    %cst_25 = arith.constant dense<0.000000e+00> : vector<256xf32>
    %96 = vector.multi_reduction <add>, %95, %cst_25 [0] : vector<128x256xf32> to vector<256xf32>
    %97 = vector.shape_cast %96 : vector<256xf32> to vector<1x256xf32>
    %c0_26 = arith.constant 0 : index
    %c0_27 = arith.constant 0 : index
    %98 = vector.load %arg6[%c0_26, %c0_27] : memref<8x256xf32, #tpu.memory_space<vmem>>, vector<1x256xf32>
    tpu.vector_store %arg6[%c0_26, %c0_27], %97 {strides = array<i32>} : memref<8x256xf32, #tpu.memory_space<vmem>>, vector<1x256xf32>,
    %99 = vector.extract_strided_slice %89 {offsets = [0, 1], sizes = [128, 1], strides = [1, 1]} : vector<128x8xf32> to vector<128x1xf32>
    %c1 = arith.constant 1 : index
    %c0_28 = arith.constant 0 : index
    %c0_29 = arith.constant 0 : index
    %100 = vector.load %arg5[%c1, %c0_28, %c0_29] : memref<8x128x256xbf16, #tpu.memory_space<vmem>>, vector<1x128x256xbf16>
    %101 = vector.shape_cast %100 : vector<1x128x256xbf16> to vector<128x256xbf16>
    %102 = arith.extf %101 : vector<128x256xbf16> to vector<128x256xf32>
    %103 = vector.broadcast %99 : vector<128x1xf32> to vector<128x256xf32>
    %104 = arith.mulf %103, %102 : vector<128x256xf32>
    %cst_30 = arith.constant dense<0.000000e+00> : vector<256xf32>
    %105 = vector.multi_reduction <add>, %104, %cst_30 [0] : vector<128x256xf32> to vector<256xf32>
    %106 = vector.shape_cast %105 : vector<256xf32> to vector<1x256xf32>
    %c1_31 = arith.constant 1 : index
    %c0_32 = arith.constant 0 : index
    %107 = vector.load %arg6[%c1_31, %c0_32] : memref<8x256xf32, #tpu.memory_space<vmem>>, vector<1x256xf32>
    tpu.vector_store %arg6[%c1_31, %c0_32], %106 {strides = array<i32>} : memref<8x256xf32, #tpu.memory_space<vmem>>, vector<1x256xf32>,
    %108 = vector.extract_strided_slice %89 {offsets = [0, 2], sizes = [128, 1], strides = [1, 1]} : vector<128x8xf32> to vector<128x1xf32>
    %c2 = arith.constant 2 : index
    %c0_33 = arith.constant 0 : index
    %c0_34 = arith.constant 0 : index
    %109 = vector.load %arg5[%c2, %c0_33, %c0_34] : memref<8x128x256xbf16, #tpu.memory_space<vmem>>, vector<1x128x256xbf16>
    %110 = vector.shape_cast %109 : vector<1x128x256xbf16> to vector<128x256xbf16>
    %111 = arith.extf %110 : vector<128x256xbf16> to vector<128x256xf32>
    %112 = vector.broadcast %108 : vector<128x1xf32> to vector<128x256xf32>
    %113 = arith.mulf %112, %111 : vector<128x256xf32>
    %cst_35 = arith.constant dense<0.000000e+00> : vector<256xf32>
    %114 = vector.multi_reduction <add>, %113, %cst_35 [0] : vector<128x256xf32> to vector<256xf32>
    %115 = vector.shape_cast %114 : vector<256xf32> to vector<1x256xf32>
    %c2_36 = arith.constant 2 : index
    %c0_37 = arith.constant 0 : index
    %116 = vector.load %arg6[%c2_36, %c0_37] : memref<8x256xf32, #tpu.memory_space<vmem>>, vector<1x256xf32>
    tpu.vector_store %arg6[%c2_36, %c0_37], %115 {strides = array<i32>} : memref<8x256xf32, #tpu.memory_space<vmem>>, vector<1x256xf32>,
    %117 = vector.extract_strided_slice %89 {offsets = [0, 3], sizes = [128, 1], strides = [1, 1]} : vector<128x8xf32> to vector<128x1xf32>
    %c3 = arith.constant 3 : index
    %c0_38 = arith.constant 0 : index
    %c0_39 = arith.constant 0 : index
    %118 = vector.load %arg5[%c3, %c0_38, %c0_39] : memref<8x128x256xbf16, #tpu.memory_space<vmem>>, vector<1x128x256xbf16>
    %119 = vector.shape_cast %118 : vector<1x128x256xbf16> to vector<128x256xbf16>
    %120 = arith.extf %119 : vector<128x256xbf16> to vector<128x256xf32>
    %121 = vector.broadcast %117 : vector<128x1xf32> to vector<128x256xf32>
    %122 = arith.mulf %121, %120 : vector<128x256xf32>
    %cst_40 = arith.constant dense<0.000000e+00> : vector<256xf32>
    %123 = vector.multi_reduction <add>, %122, %cst_40 [0] : vector<128x256xf32> to vector<256xf32>
    %124 = vector.shape_cast %123 : vector<256xf32> to vector<1x256xf32>
    %c3_41 = arith.constant 3 : index
    %c0_42 = arith.constant 0 : index
    %125 = vector.load %arg6[%c3_41, %c0_42] : memref<8x256xf32, #tpu.memory_space<vmem>>, vector<1x256xf32>
    tpu.vector_store %arg6[%c3_41, %c0_42], %124 {strides = array<i32>} : memref<8x256xf32, #tpu.memory_space<vmem>>, vector<1x256xf32>,
    %126 = vector.extract_strided_slice %89 {offsets = [0, 4], sizes = [128, 1], strides = [1, 1]} : vector<128x8xf32> to vector<128x1xf32>
    %c4 = arith.constant 4 : index
    %c0_43 = arith.constant 0 : index
    %c0_44 = arith.constant 0 : index
    %127 = vector.load %arg5[%c4, %c0_43, %c0_44] : memref<8x128x256xbf16, #tpu.memory_space<vmem>>, vector<1x128x256xbf16>
    %128 = vector.shape_cast %127 : vector<1x128x256xbf16> to vector<128x256xbf16>
    %129 = arith.extf %128 : vector<128x256xbf16> to vector<128x256xf32>
    %130 = vector.broadcast %126 : vector<128x1xf32> to vector<128x256xf32>
    %131 = arith.mulf %130, %129 : vector<128x256xf32>
    %cst_45 = arith.constant dense<0.000000e+00> : vector<256xf32>
    %132 = vector.multi_reduction <add>, %131, %cst_45 [0] : vector<128x256xf32> to vector<256xf32>
    %133 = vector.shape_cast %132 : vector<256xf32> to vector<1x256xf32>
    %c4_46 = arith.constant 4 : index
    %c0_47 = arith.constant 0 : index
    %134 = vector.load %arg6[%c4_46, %c0_47] : memref<8x256xf32, #tpu.memory_space<vmem>>, vector<1x256xf32>
    tpu.vector_store %arg6[%c4_46, %c0_47], %133 {strides = array<i32>} : memref<8x256xf32, #tpu.memory_space<vmem>>, vector<1x256xf32>,
    %135 = vector.extract_strided_slice %89 {offsets = [0, 5], sizes = [128, 1], strides = [1, 1]} : vector<128x8xf32> to vector<128x1xf32>
    %c5 = arith.constant 5 : index
    %c0_48 = arith.constant 0 : index
    %c0_49 = arith.constant 0 : index
    %136 = vector.load %arg5[%c5, %c0_48, %c0_49] : memref<8x128x256xbf16, #tpu.memory_space<vmem>>, vector<1x128x256xbf16>
    %137 = vector.shape_cast %136 : vector<1x128x256xbf16> to vector<128x256xbf16>
    %138 = arith.extf %137 : vector<128x256xbf16> to vector<128x256xf32>
    %139 = vector.broadcast %135 : vector<128x1xf32> to vector<128x256xf32>
    %140 = arith.mulf %139, %138 : vector<128x256xf32>
    %cst_50 = arith.constant dense<0.000000e+00> : vector<256xf32>
    %141 = vector.multi_reduction <add>, %140, %cst_50 [0] : vector<128x256xf32> to vector<256xf32>
    %142 = vector.shape_cast %141 : vector<256xf32> to vector<1x256xf32>
    %c5_51 = arith.constant 5 : index
    %c0_52 = arith.constant 0 : index
    %143 = vector.load %arg6[%c5_51, %c0_52] : memref<8x256xf32, #tpu.memory_space<vmem>>, vector<1x256xf32>
    tpu.vector_store %arg6[%c5_51, %c0_52], %142 {strides = array<i32>} : memref<8x256xf32, #tpu.memory_space<vmem>>, vector<1x256xf32>,
    %144 = vector.extract_strided_slice %89 {offsets = [0, 6], sizes = [128, 1], strides = [1, 1]} : vector<128x8xf32> to vector<128x1xf32>
    %c6 = arith.constant 6 : index
    %c0_53 = arith.constant 0 : index
    %c0_54 = arith.constant 0 : index
    %145 = vector.load %arg5[%c6, %c0_53, %c0_54] : memref<8x128x256xbf16, #tpu.memory_space<vmem>>, vector<1x128x256xbf16>
    %146 = vector.shape_cast %145 : vector<1x128x256xbf16> to vector<128x256xbf16>
    %147 = arith.extf %146 : vector<128x256xbf16> to vector<128x256xf32>
    %148 = vector.broadcast %144 : vector<128x1xf32> to vector<128x256xf32>
    %149 = arith.mulf %148, %147 : vector<128x256xf32>
    %cst_55 = arith.constant dense<0.000000e+00> : vector<256xf32>
    %150 = vector.multi_reduction <add>, %149, %cst_55 [0] : vector<128x256xf32> to vector<256xf32>
    %151 = vector.shape_cast %150 : vector<256xf32> to vector<1x256xf32>
    %c6_56 = arith.constant 6 : index
    %c0_57 = arith.constant 0 : index
    %152 = vector.load %arg6[%c6_56, %c0_57] : memref<8x256xf32, #tpu.memory_space<vmem>>, vector<1x256xf32>
    tpu.vector_store %arg6[%c6_56, %c0_57], %151 {strides = array<i32>} : memref<8x256xf32, #tpu.memory_space<vmem>>, vector<1x256xf32>,
    %153 = vector.extract_strided_slice %89 {offsets = [0, 7], sizes = [128, 1], strides = [1, 1]} : vector<128x8xf32> to vector<128x1xf32>
    %c7 = arith.constant 7 : index
    %c0_58 = arith.constant 0 : index
    %c0_59 = arith.constant 0 : index
    %154 = vector.load %arg5[%c7, %c0_58, %c0_59] : memref<8x128x256xbf16, #tpu.memory_space<vmem>>, vector<1x128x256xbf16>
    %155 = vector.shape_cast %154 : vector<1x128x256xbf16> to vector<128x256xbf16>
    %156 = arith.extf %155 : vector<128x256xbf16> to vector<128x256xf32>
    %157 = vector.broadcast %153 : vector<128x1xf32> to vector<128x256xf32>
    %158 = arith.mulf %157, %156 : vector<128x256xf32>
    %cst_60 = arith.constant dense<0.000000e+00> : vector<256xf32>
    %159 = vector.multi_reduction <add>, %158, %cst_60 [0] : vector<128x256xf32> to vector<256xf32>
    %160 = vector.shape_cast %159 : vector<256xf32> to vector<1x256xf32>
    %c7_61 = arith.constant 7 : index
    %c0_62 = arith.constant 0 : index
    %161 = vector.load %arg6[%c7_61, %c0_62] : memref<8x256xf32, #tpu.memory_space<vmem>>, vector<1x256xf32>
    tpu.vector_store %arg6[%c7_61, %c0_62], %160 {strides = array<i32>} : memref<8x256xf32, #tpu.memory_space<vmem>>, vector<1x256xf32>,
    return
  }
  func.func @transform_0(%arg0: i32) -> (i32, i32) {
    %c0_i32 = arith.constant 0 : i32
    %c0_i32_0 = arith.constant 0 : i32
    return %arg0, %c0_i32 : i32, i32
  }
  func.func @transform_1(%arg0: i32) -> (i32, i32) {
    %c0_i32 = arith.constant 0 : i32
    %c0_i32_0 = arith.constant 0 : i32
    %c0_i32_1 = arith.constant 0 : i32
    return %c0_i32, %c0_i32_0 : i32, i32
  }
  func.func @transform_2(%arg0: i32) -> (i32, i32) {
    %c0_i32 = arith.constant 0 : i32
    %c0_i32_0 = arith.constant 0 : i32
    %c0_i32_1 = arith.constant 0 : i32
    return %c0_i32, %c0_i32_0 : i32, i32
  }
  func.func @transform_3(%arg0: i32) -> (i32, i32) {
    %c0_i32 = arith.constant 0 : i32
    %c0_i32_0 = arith.constant 0 : i32
    return %arg0, %c0_i32 : i32, i32
  }
  func.func @transform_4(%arg0: i32) -> (i32, i32, i32) {
    %c0_i32 = arith.constant 0 : i32
    %c0_i32_0 = arith.constant 0 : i32
    %c0_i32_1 = arith.constant 0 : i32
    return %arg0, %c0_i32, %c0_i32_0 : i32, i32, i32
  }
  func.func @transform_5(%arg0: i32) -> (i32, i32) {
    %c0_i32 = arith.constant 0 : i32
    %c0_i32_0 = arith.constant 0 : i32
    return %arg0, %c0_i32 : i32, i32
  }
  func.func @transform_6(%arg0: i32) -> (i32, i32) {
    %c0_i32 = arith.constant 0 : i32
    %c0_i32_0 = arith.constant 0 : i32
    return %arg0, %c0_i32 : i32, i32
  }
  func.func @transform_7(%arg0: i32) -> (i32, i32) {
    %c0_i32 = arith.constant 0 : i32
    %c0_i32_0 = arith.constant 0 : i32
    return %arg0, %c0_i32 : i32, i32
  }
}

</mosaic_0001>

<llo_original>
// kernel: mas_interface_forward.1
$region0: #{mas_interface_forward.1}
  #allocation0 [shape = 'u32[]', space=smem, size = 0x4, offset = 0x4, fixed_abs, tag = 'smem constant byte address 0x4 - core index']
  #allocation1 [shape = 'u32[144,128]{1,0:T(1,128)}', space=vmem, size = 0x12000, scoped, tag = 'internal scratch']
  %s0 = inlined_call_operand.vmem [shape: f32[16,32], index: 0, kind: input, shape index: {}]
  %s1 = inlined_call_operand.vmem [shape: f32[32,7], index: 1, kind: input, shape index: {}]
  %s2 = inlined_call_operand.vmem [shape: f32[1,7], index: 2, kind: input, shape index: {}]
  %s3 = inlined_call_operand.vmem [shape: f32[16,384], index: 3, kind: input, shape index: {}]
  %s4 = inlined_call_operand.vmem [shape: bf16[16,128,256], index: 4, kind: input, shape index: {}]
  %s5 = inlined_call_operand.hbm [shape: f32[16,256], index: 5, kind: output, shape index: {0}]
  %s6 = inlined_call_operand.hbm [shape: f32[16,128], index: 6, kind: output, shape index: {1}]
  %s7 = inlined_call_operand.vmem [shape: f32[16,6], index: 7, kind: output, shape index: {2}]
  %8 = xla_tuple %s5, %s6, %s7
  %s9 = sld [smem:[#allocation0]]
  $region69: #{mas_interface_forward.1} parent=0
    _
  %s11 = ssub.s32 1, %s9
  %s12 = scalar_select 0, %s11, %s9
  $region1: #{mas_interface_forward.1} parent=0
    #allocation2 [shape = 'u8[16384]{0}', space=vmem, size = 0x4000, scoped, tag = 'output window, operand 0']
    #allocation3 [shape = 's32[2]{0}', space=sflag, size = 0x8, scoped, tag = 'scoped memory for mas_interface_forward.1']
    #allocation4 [shape = 'u8[8192]{0}', space=vmem, size = 0x2000, scoped, tag = 'output window, operand 1']
    #allocation5 [shape = 's32[2]{0}', space=sflag, size = 0x8, scoped, tag = 'scoped memory for mas_interface_forward.1']
    %13 = vsyncpa [#allocation3], 0
    %s14 = scalar_lea.sflag [#allocation3], 1
    %15 = vsyncpa %s14, 0
    %16 = vsyncpa [#allocation5], 0
    %s17 = scalar_lea.sflag [#allocation5], 1
    %18 = vsyncpa %s17, 0
    loop: start=0, step=1, limit=4
    $region2: #{mas_interface_forward.1} parent=1 // loop_pre_header
      _
    $region3: #{mas_interface_forward.1} parent=1 // loop_header
      %s20 = sphi 0, %s24
      %p21 = scmp.ge.s32.totalorder %s20, 4
      %s30 = sphi 0, %s32
      %s33 = sphi 0, %s30
      %s34 = sphi 0, %s33
      %s50 = sphi 0, %s34
      %s54 = sphi 0, %s54
      %s56 = sphi 0, %s54
      %s57 = sphi 0, %s56
      %s71 = sphi 0, %s57
      %s75 = sphi 0, %s75
      %s77 = sphi 0, %s75
      %s78 = sphi 0, %s77
      %s92 = sphi 0, %s78
      %s98 = sphi 0, %s100
      %s101 = sphi 0, %s98
      %s102 = sphi 0, %s101
      %s118 = sphi 0, %s102
      %s124 = sphi 0, %s126
      %s127 = sphi 0, %s124
      %s128 = sphi 0, %s127
      %s144 = sphi 0, %s128
      %s150 = sphi 0, %s152
      %s153 = sphi 0, %s150
      %s154 = sphi 0, %s153
      %s170 = sphi 0, %s154
      %s176 = sphi 0, %s178
      %s179 = sphi 0, %s176
      %s180 = sphi 0, %s179
      %s196 = sphi 0, %s180
      %s202 = sphi 0, %s204
      %s205 = sphi 0, %s202
      %s206 = sphi 0, %s205
      %s222 = sphi 0, %s206
    $region4: #{mas_interface_forward.1} parent=1 // loop_header_branch
      %23 = sbr.rel (%p21) target = $region8
    $region5: #{mas_interface_forward.1} parent=1 // loop_body
      %s25 = ssub.s32 %s20, 1
      %s26 = ssub.s32 %s20, 2
      %s27 = sadd.s32 %s20, 1
      %s28 = ssub.s32 %s20, %s27
      %p29 = scmp.eq.s32.totalorder %s28, 0
      %s31 = sadd.s32 %s30, 1
      %s32 = scalar_select %p29, %s30, %s31
      %p35 = pneg %p29
      %p36 = scmp.eq.s32.totalorder %s20, 1
      %p37 = por %p35, %p36
      %p38 = scmp.ne.s32.totalorder %s30, %s33
      %p39 = scmp.eq.s32.totalorder %s20, 0
      %p40 = por %p38, %p39
      %p41 = scmp.ne.s32.totalorder %s30, %s33
      %p42 = scmp.eq.s32.totalorder %s25, 1
      %p43 = por %p41, %p42
      %p44 = scmp.ne.s32.totalorder %s33, %s34
      %p45 = scmp.eq.s32.totalorder %s25, 0
      %p46 = por %p44, %p45
      %p47 = scmp.ne.s32.totalorder %s33, %s34
      %p48 = scmp.eq.s32.totalorder %s26, 1
      %p49 = por %p47, %p48
      %p51 = scmp.ne.s32.totalorder %s34, %s50
      %p52 = scmp.eq.s32.totalorder %s26, 0
      %p53 = por %p51, %p52
      %s55 = sadd.s32 %s54, 1
      %p58 = scmp.eq.s32.totalorder %s20, 1
      %p59 = scmp.ne.s32.totalorder %s54, %s56
      %p60 = scmp.eq.s32.totalorder %s20, 0
      %p61 = por %p59, %p60
      %p62 = scmp.ne.s32.totalorder %s54, %s56
      %p63 = scmp.eq.s32.totalorder %s25, 1
      %p64 = por %p62, %p63
      %p65 = scmp.ne.s32.totalorder %s56, %s57
      %p66 = scmp.eq.s32.totalorder %s25, 0
      %p67 = por %p65, %p66
      %p68 = scmp.ne.s32.totalorder %s56, %s57
      %p69 = scmp.eq.s32.totalorder %s26, 1
      %p70 = por %p68, %p69
      %p72 = scmp.ne.s32.totalorder %s57, %s71
      %p73 = scmp.eq.s32.totalorder %s26, 0
      %p74 = por %p72, %p73
      %s76 = sadd.s32 %s75, 1
      %p79 = scmp.eq.s32.totalorder %s20, 1
      %p80 = scmp.ne.s32.totalorder %s75, %s77
      %p81 = scmp.eq.s32.totalorder %s20, 0
      %p82 = por %p80, %p81
      %p83 = scmp.ne.s32.totalorder %s75, %s77
      %p84 = scmp.eq.s32.totalorder %s25, 1
      %p85 = por %p83, %p84
      %p86 = scmp.ne.s32.totalorder %s77, %s78
      %p87 = scmp.eq.s32.totalorder %s25, 0
      %p88 = por %p86, %p87
      %p89 = scmp.ne.s32.totalorder %s77, %s78
      %p90 = scmp.eq.s32.totalorder %s26, 1
      %p91 = por %p89, %p90
      %p93 = scmp.ne.s32.totalorder %s78, %s92
      %p94 = scmp.eq.s32.totalorder %s26, 0
      %p95 = por %p93, %p94
      %s96 = ssub.s32 %s20, %s27
      %p97 = scmp.eq.s32.totalorder %s96, 0
      %s99 = sadd.s32 %s98, 1
      %s100 = scalar_select %p97, %s98, %s99
      %p103 = pneg %p97
      %p104 = scmp.eq.s32.totalorder %s20, 1
      %p105 = por %p103, %p104
      %p106 = scmp.ne.s32.totalorder %s98, %s101
      %p107 = scmp.eq.s32.totalorder %s20, 0
      %p108 = por %p106, %p107
      %p109 = scmp.ne.s32.totalorder %s98, %s101
      %p110 = scmp.eq.s32.totalorder %s25, 1
      %p111 = por %p109, %p110
      %p112 = scmp.ne.s32.totalorder %s101, %s102
      %p113 = scmp.eq.s32.totalorder %s25, 0
      %p114 = por %p112, %p113
      %p115 = scmp.ne.s32.totalorder %s101, %s102
      %p116 = scmp.eq.s32.totalorder %s26, 1
      %p117 = por %p115, %p116
      %p119 = scmp.ne.s32.totalorder %s102, %s118
      %p120 = scmp.eq.s32.totalorder %s26, 0
      %p121 = por %p119, %p120
      %s122 = ssub.s32 %s20, %s27
      %p123 = scmp.eq.s32.totalorder %s122, 0
      %s125 = sadd.s32 %s124, 1
      %s126 = scalar_select %p123, %s124, %s125
      %p129 = pneg %p123
      %p130 = scmp.eq.s32.totalorder %s20, 1
      %p131 = por %p129, %p130
      %p132 = scmp.ne.s32.totalorder %s124, %s127
      %p133 = scmp.eq.s32.totalorder %s20, 0
      %p134 = por %p132, %p133
      %p135 = scmp.ne.s32.totalorder %s124, %s127
      %p136 = scmp.eq.s32.totalorder %s25, 1
      %p137 = por %p135, %p136
      %p138 = scmp.ne.s32.totalorder %s127, %s128
      %p139 = scmp.eq.s32.totalorder %s25, 0
      %p140 = por %p138, %p139
      %p141 = scmp.ne.s32.totalorder %s127, %s128
      %p142 = scmp.eq.s32.totalorder %s26, 1
      %p143 = por %p141, %p142
      %p145 = scmp.ne.s32.totalorder %s128, %s144
      %p146 = scmp.eq.s32.totalorder %s26, 0
      %p147 = por %p145, %p146
      %s148 = ssub.s32 %s20, %s27
      %p149 = scmp.eq.s32.totalorder %s148, 0
      %s151 = sadd.s32 %s150, 1
      %s152 = scalar_select %p149, %s150, %s151
      %p155 = pneg %p149
      %p156 = scmp.eq.s32.totalorder %s20, 1
      %p157 = por %p155, %p156
      %p158 = scmp.ne.s32.totalorder %s150, %s153
      %p159 = scmp.eq.s32.totalorder %s20, 0
      %p160 = por %p158, %p159
      %p161 = scmp.ne.s32.totalorder %s150, %s153
      %p162 = scmp.eq.s32.totalorder %s25, 1
      %p163 = por %p161, %p162
      %p164 = scmp.ne.s32.totalorder %s153, %s154
      %p165 = scmp.eq.s32.totalorder %s25, 0
      %p166 = por %p164, %p165
      %p167 = scmp.ne.s32.totalorder %s153, %s154
      %p168 = scmp.eq.s32.totalorder %s26, 1
      %p169 = por %p167, %p168
      %p171 = scmp.ne.s32.totalorder %s154, %s170
      %p172 = scmp.eq.s32.totalorder %s26, 0
      %p173 = por %p171, %p172
      %s174 = ssub.s32 %s20, %s27
      %p175 = scmp.eq.s32.totalorder %s174, 0
      %s177 = sadd.s32 %s176, 1
      %s178 = scalar_select %p175, %s176, %s177
      %p181 = pneg %p175
      %p182 = scmp.eq.s32.totalorder %s20, 1
      %p183 = por %p181, %p182
      %p184 = scmp.ne.s32.totalorder %s176, %s179
      %p185 = scmp.eq.s32.totalorder %s20, 0
      %p186 = por %p184, %p185
      %p187 = scmp.ne.s32.totalorder %s176, %s179
      %p188 = scmp.eq.s32.totalorder %s25, 1
      %p189 = por %p187, %p188
      %p190 = scmp.ne.s32.totalorder %s179, %s180
      %p191 = scmp.eq.s32.totalorder %s25, 0
      %p192 = por %p190, %p191
      %p193 = scmp.ne.s32.totalorder %s179, %s180
      %p194 = scmp.eq.s32.totalorder %s26, 1
      %p195 = por %p193, %p194
      %p197 = scmp.ne.s32.totalorder %s180, %s196
      %p198 = scmp.eq.s32.totalorder %s26, 0
      %p199 = por %p197, %p198
      %s200 = ssub.s32 %s20, %s27
      %p201 = scmp.eq.s32.totalorder %s200, 0
      %s203 = sadd.s32 %s202, 1
      %s204 = scalar_select %p201, %s202, %s203
      %p207 = pneg %p201
      %p208 = scmp.eq.s32.totalorder %s20, 1
      %p209 = por %p207, %p208
      %p210 = scmp.ne.s32.totalorder %s202, %s205
      %p211 = scmp.eq.s32.totalorder %s20, 0
      %p212 = por %p210, %p211
      %p213 = scmp.ne.s32.totalorder %s202, %s205
      %p214 = scmp.eq.s32.totalorder %s25, 1
      %p215 = por %p213, %p214
      %p216 = scmp.ne.s32.totalorder %s205, %s206
      %p217 = scmp.eq.s32.totalorder %s25, 0
      %p218 = por %p216, %p217
      %p219 = scmp.ne.s32.totalorder %s205, %s206
      %p220 = scmp.eq.s32.totalorder %s26, 1
      %p221 = por %p219, %p220
      %p223 = scmp.ne.s32.totalorder %s206, %s222
      %p224 = scmp.eq.s32.totalorder %s26, 0
      %p225 = por %p223, %p224
      %p226 = scmp.le.s32.totalorder 1, %s20
      %p227 = scmp.lt.s32.totalorder %s20, 3
      %p228 = pnand %p226, %p227
      %p229 = pneg %p228
      // Predicated region
      $region9: #{mas_interface_forward.1} parent=5 // pred_check
        _
      $region10: #{mas_interface_forward.1} parent=5 // pred_check_branch
        %231 = sbr.rel (%p228) target = $region12
      $region11: #{mas_interface_forward.1} parent=5 // pred_region
        %s232 = ssub.s32 %s20, 1
        // Predicated region
        $region13: #{mas_interface_forward.1} parent=11 // pred_check
          %p233 = pneg %p67
        $region14: #{mas_interface_forward.1} parent=11 // pred_check_branch
          %235 = sbr.rel (%p233) target = $region16
        $region15: #{mas_interface_forward.1} parent=11 // pred_region
          _
        $region16: #{mas_interface_forward.1} parent=11 // pred_fallthru
          _
        // Predicated region
        $region17: #{mas_interface_forward.1} parent=11 // pred_check
          %p236 = pneg %p88
        $region18: #{mas_interface_forward.1} parent=11 // pred_check_branch
          %238 = sbr.rel (%p236) target = $region20
        $region19: #{mas_interface_forward.1} parent=11 // pred_region
          _
        $region20: #{mas_interface_forward.1} parent=11 // pred_fallthru
          _
      $region12: #{mas_interface_forward.1} parent=5 // pred_fallthru
        _
      %p239 = scmp.lt.s32.totalorder %s20, 2
      // Predicated region
      $region21: #{mas_interface_forward.1} parent=5 // pred_check
        %p240 = pneg %p239
      $region22: #{mas_interface_forward.1} parent=5 // pred_check_branch
        %242 = sbr.rel (%p240) target = $region24
      $region23: #{mas_interface_forward.1} parent=5 // pred_region
        // Predicated region
        $region25: #{mas_interface_forward.1} parent=23 // pred_check
          %p243 = pneg %p40
        $region26: #{mas_interface_forward.1} parent=23 // pred_check_branch
          %245 = sbr.rel (%p243) target = $region28
        $region27: #{mas_interface_forward.1} parent=23 // pred_region
          %p246 = scmp.lt.s32.totalorder %s20, 1
          %s247 = scalar_select %p246, %s20, 1
          %s248 = smul.addr %s247, 8
          %s249 = scalar_lea.vmem %s0, %s248
        $region28: #{mas_interface_forward.1} parent=23 // pred_fallthru
          _
        // Predicated region
        $region29: #{mas_interface_forward.1} parent=23 // pred_check
          %p250 = pneg %p108
        $region30: #{mas_interface_forward.1} parent=23 // pred_check_branch
          %252 = sbr.rel (%p250) target = $region32
        $region31: #{mas_interface_forward.1} parent=23 // pred_region
          %p253 = scmp.lt.s32.totalorder %s20, 1
          %s254 = scalar_select %p253, %s20, 1
          %s255 = smul.addr %s254, 3
          %s256 = smul.addr %s255, 8
          %s257 = scalar_lea.vmem %s3, %s256
        $region32: #{mas_interface_forward.1} parent=23 // pred_fallthru
          _
        // Predicated region
        $region33: #{mas_interface_forward.1} parent=23 // pred_check
          %p258 = pneg %p134
        $region34: #{mas_interface_forward.1} parent=23 // pred_check_branch
          %260 = sbr.rel (%p258) target = $region36
        $region35: #{mas_interface_forward.1} parent=23 // pred_region
          %s261 = smul.u32 8, %s20
          %p262 = scmp.lt.s32.totalorder %s261, 15
          %s263 = scalar_select %p262, %s261, 15
          %s264 = smul.addr %s263, 32
          %s265 = smul.addr %s264, 4
          %s266 = scalar_lea.vmem %s4, %s265
          %s267 = smul.u32 8, %s20
        $region36: #{mas_interface_forward.1} parent=23 // pred_fallthru
          _
      $region24: #{mas_interface_forward.1} parent=5 // pred_fallthru
        _
      %p268 = scmp.le.s32.totalorder 1, %s20
      %p269 = scmp.lt.s32.totalorder %s20, 3
      %p270 = pnand %p268, %p269
      %p271 = pneg %p270
      // Predicated region
      $region37: #{mas_interface_forward.1} parent=5 // pred_check
        _
      $region38: #{mas_interface_forward.1} parent=5 // pred_check_branch
        %273 = sbr.rel (%p270) target = $region40
      $region39: #{mas_interface_forward.1} parent=5 // pred_region
        %s274 = ssub.s32 %s20, 1
        %p275 = scmp.lt.s32.totalorder %s25, 1
        %s276 = scalar_select %p275, %s25, 1
        %s277 = smul.addr %s276, 8
        %s278 = scalar_lea.vmem %s0, %s277
        %p279 = pneg %p46
        %p280 = pneg %p43
        %p281 = pneg %p67
        %p282 = pneg %p64
        %p283 = pneg %p88
        %p284 = pneg %p85
        %p285 = scmp.lt.s32.totalorder %s25, 1
        %s286 = scalar_select %p285, %s25, 1
        %s287 = smul.addr %s286, 3
        %s288 = smul.addr %s287, 8
        %s289 = scalar_lea.vmem %s3, %s288
        %p290 = pneg %p114
        %p291 = pneg %p111
        %s292 = smul.u32 8, %s25
        %p293 = scmp.lt.s32.totalorder %s292, 15
        %s294 = scalar_select %p293, %s292, 15
        %s295 = smul.addr %s294, 32
        %s296 = smul.addr %s295, 4
        %s297 = scalar_lea.vmem %s4, %s296
        %p298 = pneg %p140
        %p299 = pneg %p137
        %p300 = pneg %p166
        %p301 = pneg %p163
        %s302 = sand.u32 %s153, 1
        %s303 = scalar_lea.sflag [#allocation3], %s302
        %s304 = sand.u32 %s153, 1
        %s305 = smul.addr %s304, 16
        %s306 = scalar_lea.vmem [#allocation2], %s305
        %p307 = pneg %p192
        %p308 = pneg %p189
        %s309 = sand.u32 %s179, 1
        %s310 = scalar_lea.sflag [#allocation5], %s309
        %s311 = sand.u32 %s179, 1
        %s312 = smul.addr %s311, 8
        %s313 = scalar_lea.vmem [#allocation4], %s312
        %p314 = pneg %p218
        %p315 = pneg %p215
        %p316 = scmp.lt.s32.totalorder %s25, 1
        %s317 = scalar_select %p316, %s25, 1
        %s318 = smul.addr %s317, 8
        %s319 = scalar_lea.vmem %s7, %s318
        %p320 = scmp.lt.s32.totalorder %s25, 1
        %s321 = scalar_select %p320, %s25, 1
        %s322 = smul.addr %s321, 8
        %s323 = scalar_lea.vmem %s0, %s322
        %p324 = scmp.lt.s32.totalorder %s25, 1
        %s325 = scalar_select %p324, %s25, 1
        %s326 = smul.addr %s325, 3
        %s327 = smul.addr %s326, 8
        %s328 = scalar_lea.vmem %s3, %s327
        %s329 = smul.u32 8, %s25
        %p330 = scmp.lt.s32.totalorder %s329, 15
        %s331 = scalar_select %p330, %s329, 15
        %s332 = smul.addr %s331, 32
        %s333 = smul.addr %s332, 4
        %s334 = scalar_lea.vmem %s4, %s333
        %s335 = smul.u32 8, %s25
        %p336 = scmp.lt.s32.totalorder %s25, 1
        %s337 = scalar_select %p336, %s25, 1
        %s338 = smul.addr %s337, 8
        %s339 = scalar_lea.vmem %s7, %s338
        %v340 = vld [vmem:[%s323] sm:$0xff]
        %v341 = vld [vmem:[%s1] sm:$0xff]
        %v342 = vld [vmem:[%s1 + $0x8] sm:$0xff]
        %v343 = vld [vmem:[%s1 + $0x10] sm:$0xff]
        %v344 = vld [vmem:[%s1 + $0x18] sm:$0xff]
        %v345 = vld [vmem:[%s2] sm:$0x1]
        %v347 = vlaneseq
        %v348 = vshrl.u32 %v347, 7
        %v349 = vsub.s32 0, %v348
        %v350 = vrot.slane %v345, %v349
        %vm352 = vcmask 261120
        %v354 = vsel %vm352, %v340, 0
        %356 = vmatprep.subr.mxu0 0.0
        %357 = vmatpush1.msra.mxu0 %v341
        %358 = vmatprep.subr.mxu0 0.0
        %359 = vmatpush1.msra.mxu0 %v342
        %360 = vmatprep.subr.mxu0 0.0
        %361 = vmatpush1.msra.mxu0 %v343
        %362 = vmatprep.subr.mxu0 0.0
        %363 = vmatpush1.msra.mxu0 %v344
        %364 = vmatprep.subr.mxu0 0.0
        %365 = vmatpush1.msra.mxu0 0.0
        %366 = vmatprep.subr.mxu0 0.0
        %367 = vmatpush1.msra.mxu0 0.0
        %368 = vmatprep.subr.mxu0 0.0
        %369 = vmatpush1.msra.mxu0 0.0
        %370 = vmatprep.subr.mxu0 0.0
        %371 = vmatpush1.msra.mxu0 0.0
        %372 = vmatprep.subr.mxu0 0.0
        %373 = vmatpush1.msra.mxu0 0.0
        %374 = vmatprep.subr.mxu0 0.0
        %375 = vmatpush1.msra.mxu0 0.0
        %376 = vmatprep.subr.mxu0 0.0
        %377 = vmatpush1.msra.mxu0 0.0
        %378 = vmatprep.subr.mxu0 0.0
        %379 = vmatpush1.msra.mxu0 0.0
        %380 = vmatprep.subr.mxu0 0.0
        %381 = vmatpush1.msra.mxu0 0.0
        %382 = vmatprep.subr.mxu0 0.0
        %383 = vmatpush1.msra.mxu0 0.0
        %384 = vmatprep.subr.mxu0 0.0
        %385 = vmatpush1.msra.mxu0 0.0
        %386 = vmatprep.subr.mxu0 0.0
        %387 = vmatpush1.msra.mxu0 0.0
        %388 = vmatprep.subr.mxu0 0.0
        %389 = vmatpush1.msra.mxu0 0.0
        %390 = vmatprep.subr.mxu0 0.0
        %391 = vmatpush1.msra.mxu0 0.0
        %392 = vmatprep.subr.mxu0 0.0
        %393 = vmatpush1.msra.mxu0 0.0
        %394 = vmatprep.subr.mxu0 0.0
        %395 = vmatpush1.msra.mxu0 0.0
        %396 = vmatprep.subr.mxu0 0.0
        %397 = vmatpush1.msra.mxu0 0.0
        %398 = vmatprep.subr.mxu0 0.0
        %399 = vmatpush1.msra.mxu0 0.0
        %400 = vmatprep.subr.mxu0 0.0
        %401 = vmatpush1.msra.mxu0 0.0
        %402 = vmatprep.subr.mxu0 0.0
        %403 = vmatpush1.msra.mxu0 0.0
        %404 = vmatprep.subr.mxu0 0.0
        %405 = vmatpush1.msra.mxu0 0.0
        %406 = vmatprep.subr.mxu0 0.0
        %407 = vmatpush1.msra.mxu0 0.0
        %408 = vmatprep.subr.mxu0 0.0
        %409 = vmatpush1.msra.mxu0 0.0
        %410 = vmatprep.subr.mxu0 0.0
        %411 = vmatpush1.msra.mxu0 0.0
        %412 = vmatprep.subr.mxu0 0.0
        %413 = vmatpush1.msra.mxu0 0.0
        %414 = vmatprep.subr.mxu0 0.0
        %415 = vmatpush1.msra.mxu0 0.0
        %416 = vmatprep.subr.mxu0 0.0
        %417 = vmatpush1.msra.mxu0 0.0
        %418 = vmatprep.subr.mxu0 0.0
        %419 = vmatpush1.msra.mxu0 0.0
        %420 = vmatprep.mubr.f32.mxu0 0.0
        %421 = vmatmul.mubr.f32.gmra.mrb[0].mxu0 %v354
        %v422 = vpop.f32.mrb[0].mxu0
        %v423 = vadd.f32 %v350, %v422
        %v424 = vpop.f32.mrb[0].mxu0
        %425 = vdwg.mxu0
        %v426 = vxor.u32 %v423, 2147483648
        %v427 = vmul.f32 %v426, 1.442695
        %v428 = vpow.pop %v427
        %v429 = vadd.f32 %v428, 1.0
        %v430 = vrcp.pop %v429
        %v431 = vmul.f32 1.0, %v430
        %vm432 = vcmask 48152
        %v433 = vsel %vm432, %v423, -inf
        %434 = vmax.xlane.f32.xlu0 %v433
        %v435 = vpop.xlane.xlu0 %434
        %v436 = vsub.f32 %v423, %v435
        %v437 = vmul.f32 %v436, 1.442695
        %v438 = vpow.pop %v437
        %440 = vrot.lane.b32.xlu0 %v438, 125
        %v441 = vpop.permute.xlu0 %440
        %vm443 = vcmask 23552
        %v444 = vsel %vm443, %v441, 0.0
        %445 = vadd.xlane.f32.xlu0 %v444
        %v446 = vpop.xlane.xlu0 %445
        %v447 = vrcp.pop %v446
        %v448 = vmul.f32 %v438, %v447
        %v449 = vmax.f32 %v423, 0.0
        %vm450 = vcmp.ne.f32.partialorder %v423, %v423
        %v451 = vadd.f32 %v423, 0.0
        %v452 = vand.u32 2147483647, %v423
        %v453 = vsub.f32 0.0, %v452
        %v454 = vmul.f32 %v453, 1.442695
        %v455 = vpow.pop %v454
        %v456 = vadd.f32 %v455, 1.0
        %v457 = vlog2.pop %v456
        %v458 = vmul.f32 %v457, 0.6931472
        %v459 = vmul.f32 -0.5, %v455
        %v460 = vadd.f32 %v459, 1.0
        %v461 = vmul.f32 %v460, %v455
        %v462 = vand.u32 2147483647, %v455
        %vm463 = vcmp.lt.f32.partialorder %v462, 0.0004427343
        %v464 = vsel %vm463, %v461, %v458
        %v465 = vadd.f32 %v449, %v464
        %v466 = vsel %vm450, %v451, %v465
        %v467 = vadd.f32 %v466, 1.0
        %v468 = vld [vmem:[%s328] sm:$0xff]
        %v469 = vld [vmem:[%s328 + $0x8] sm:$0xff]
        %v470 = vld [vmem:[%s328 + $0x10] sm:$0xff]
        %472 = vrot.lane.b32.xlu0 %v468, 1
        %v473 = vpop.permute.xlu0 %472
        %476 = vset.pattern.permute.xlu0 3
        %477 = vperm.xlu0 %476, %v448
        %v478 = vpop.permute.xlu0 %477
        %v480 = vmul.f32 %v478, %v473
        %v481 = vadd.f32 %v480, 0.0
        %482 = vset.pattern.permute.xlu0 4
        %483 = vperm.xlu0 %482, %v448
        %v484 = vpop.permute.xlu0 %483
        %v486 = vmul.f32 %v484, %v468
        %v487 = vadd.f32 %v481, %v486
        %488 = vrot.lane.b32.xlu0 %v468, 127
        %v489 = vpop.permute.xlu0 %488
        %491 = vset.pattern.permute.xlu0 5
        %492 = vperm.xlu0 %491, %v448
        %v493 = vpop.permute.xlu0 %492
        %v495 = vmul.f32 %v493, %v489
        %v496 = vadd.f32 %v487, %v495
        %v497 = vadd.f32 %v496, 1e-12
        %499 = vset.pattern.permute.xlu0 6
        %500 = vperm.xlu0 %499, %v467
        %v501 = vpop.permute.xlu0 %500
        %v503 = vpow.f32 %v497, %v501
        %v504 = vand.u32 2147483647, %v503
        %505 = vadd.xlane.f32.xlu0 %v504
        %v506 = vpop.xlane.xlu0 %505
        %v507 = vmax.f32 %v506, 1e-12
        %v508 = vrcp.pop %v507
        %v509 = vmul.f32 %v503, %v508
        %511 = vset.pattern.permute.xlu0 0
        %512 = vperm.xlu0 %511, %v431
        %v513 = vpop.permute.xlu0 %512
        %v515 = vmul.f32 %v513, %v509
        %516 = vset.pattern.permute.xlu0 1
        %517 = vperm.xlu0 %516, %v431
        %v518 = vpop.permute.xlu0 %517
        %v520 = vmul.f32 %v518, %v469
        %v521 = vadd.f32 %v515, %v520
        %522 = vset.pattern.permute.xlu0 2
        %523 = vperm.xlu0 %522, %v431
        %v524 = vpop.permute.xlu0 %523
        %v526 = vmul.f32 %v524, %v470
        %v527 = vadd.f32 %v521, %v526
        %528 = vst [vmem:[%s313] sm:$0xff] %v527
        %v529 = vsel %vm443, %v431, %v448
        %vm530 = vcmask 48128
        %531 = vst.msk [vmem:[%s339] sm:$0xff] %vm530, %v529
        %532 = vxpose.xlu0.b32.start [1/16] %v527, 128
        %533 = vxpose.xlu0.b32.cont [2/16] 0.0, 128
        %534 = vxpose.xlu0.b32.cont [3/16] 0.0, 128
        %535 = vxpose.xlu0.b32.cont [4/16] 0.0, 128
        %536 = vxpose.xlu0.b32.cont [5/16] 0.0, 128
        %537 = vxpose.xlu0.b32.cont [6/16] 0.0, 128
        %538 = vxpose.xlu0.b32.cont [7/16] 0.0, 128
        %539 = vxpose.xlu0.b32.cont [8/16] 0.0, 128
        %540 = vxpose.xlu0.b32.cont [9/16] 0.0, 128
        %541 = vxpose.xlu0.b32.cont [10/16] 0.0, 128
        %542 = vxpose.xlu0.b32.cont [11/16] 0.0, 128
        %543 = vxpose.xlu0.b32.cont [12/16] 0.0, 128
        %544 = vxpose.xlu0.b32.cont [13/16] 0.0, 128
        %545 = vxpose.xlu0.b32.cont [14/16] 0.0, 128
        %546 = vxpose.xlu0.b32.cont [15/16] 0.0, 128
        %547 = vxpose.xlu0.b32.end [16/16] 0.0, 128
        %v548 = vpop.trf.xlu0
        %v549 = vpop.trf.xlu0
        %v550 = vpop.trf.xlu0
        %v551 = vpop.trf.xlu0
        %v552 = vpop.trf.xlu0
        %v553 = vpop.trf.xlu0
        %v554 = vpop.trf.xlu0
        %v555 = vpop.trf.xlu0
        %v556 = vpop.trf.xlu0
        %v557 = vpop.trf.xlu0
        %v558 = vpop.trf.xlu0
        %v559 = vpop.trf.xlu0
        %v560 = vpop.trf.xlu0
        %v561 = vpop.trf.xlu0
        %v562 = vpop.trf.xlu0
        %v563 = vpop.trf.xlu0
        %v564 = vld [vmem:[%s334] sm:$0xff]
        %v565 = vld [vmem:[%s334 + $0x8] sm:$0xff]
        %v566 = vld [vmem:[%s334 + $0x10] sm:$0xff]
        %v567 = vld [vmem:[%s334 + $0x18] sm:$0xff]
        %v568 = vld [vmem:[%s334 + $0x20] sm:$0xff]
        %v569 = vld [vmem:[%s334 + $0x28] sm:$0xff]
        %v570 = vld [vmem:[%s334 + $0x30] sm:$0xff]
        %v571 = vld [vmem:[%s334 + $0x38] sm:$0xff]
        %v572 = vld [vmem:[%s334 + $0x40] sm:$0xff]
        %v573 = vld [vmem:[%s334 + $0x48] sm:$0xff]
        %v574 = vld [vmem:[%s334 + $0x50] sm:$0xff]
        %v575 = vld [vmem:[%s334 + $0x58] sm:$0xff]
        %v576 = vld [vmem:[%s334 + $0x60] sm:$0xff]
        %v577 = vld [vmem:[%s334 + $0x68] sm:$0xff]
        %v578 = vld [vmem:[%s334 + $0x70] sm:$0xff]
        %v579 = vld [vmem:[%s334 + $0x78] sm:$0xff]
        %v580 = vunpack.c.l.bf16 %v564
        %v581 = vunpack.c.h.bf16 %v564
        %v582 = vunpack.c.l.bf16 %v565
        %v583 = vunpack.c.h.bf16 %v565
        %v584 = vunpack.c.l.bf16 %v566
        %v585 = vunpack.c.h.bf16 %v566
        %v586 = vunpack.c.l.bf16 %v567
        %v587 = vunpack.c.h.bf16 %v567
        %v588 = vunpack.c.l.bf16 %v568
        %v589 = vunpack.c.h.bf16 %v568
        %v590 = vunpack.c.l.bf16 %v569
        %v591 = vunpack.c.h.bf16 %v569
        %v592 = vunpack.c.l.bf16 %v570
        %v593 = vunpack.c.h.bf16 %v570
        %v594 = vunpack.c.l.bf16 %v571
        %v595 = vunpack.c.h.bf16 %v571
        %v596 = vunpack.c.l.bf16 %v572
        %v597 = vunpack.c.h.bf16 %v572
        %v598 = vunpack.c.l.bf16 %v573
        %v599 = vunpack.c.h.bf16 %v573
        %v600 = vunpack.c.l.bf16 %v574
        %v601 = vunpack.c.h.bf16 %v574
        %v602 = vunpack.c.l.bf16 %v575
        %v603 = vunpack.c.h.bf16 %v575
        %v604 = vunpack.c.l.bf16 %v576
        %v605 = vunpack.c.h.bf16 %v576
        %v606 = vunpack.c.l.bf16 %v577
        %v607 = vunpack.c.h.bf16 %v577
        %v608 = vunpack.c.l.bf16 %v578
        %v609 = vunpack.c.h.bf16 %v578
        %v610 = vunpack.c.l.bf16 %v579
        %v611 = vunpack.c.h.bf16 %v579
        %613 = vset.pattern.permute.xlu0 0
        %614 = vperm.xlu0 %613, %v548
        %v615 = vpop.permute.xlu0 %614
        %618 = vset.pattern.permute.xlu0 0
        %619 = vperm.xlu0 %618, %v549
        %v620 = vpop.permute.xlu0 %619
        %623 = vset.pattern.permute.xlu0 0
        %624 = vperm.xlu0 %623, %v550
        %v625 = vpop.permute.xlu0 %624
        %628 = vset.pattern.permute.xlu0 0
        %629 = vperm.xlu0 %628, %v551
        %v630 = vpop.permute.xlu0 %629
        %633 = vset.pattern.permute.xlu0 0
        %634 = vperm.xlu0 %633, %v552
        %v635 = vpop.permute.xlu0 %634
        %638 = vset.pattern.permute.xlu0 0
        %639 = vperm.xlu0 %638, %v553
        %v640 = vpop.permute.xlu0 %639
        %643 = vset.pattern.permute.xlu0 0
        %644 = vperm.xlu0 %643, %v554
        %v645 = vpop.permute.xlu0 %644
        %648 = vset.pattern.permute.xlu0 0
        %649 = vperm.xlu0 %648, %v555
        %v650 = vpop.permute.xlu0 %649
        %653 = vset.pattern.permute.xlu0 0
        %654 = vperm.xlu0 %653, %v556
        %v655 = vpop.permute.xlu0 %654
        %658 = vset.pattern.permute.xlu0 0
        %659 = vperm.xlu0 %658, %v557
        %v660 = vpop.permute.xlu0 %659
        %663 = vset.pattern.permute.xlu0 0
        %664 = vperm.xlu0 %663, %v558
        %v665 = vpop.permute.xlu0 %664
        %668 = vset.pattern.permute.xlu0 0
        %669 = vperm.xlu0 %668, %v559
        %v670 = vpop.permute.xlu0 %669
        %673 = vset.pattern.permute.xlu0 0
        %674 = vperm.xlu0 %673, %v560
        %v675 = vpop.permute.xlu0 %674
        %678 = vset.pattern.permute.xlu0 0
        %679 = vperm.xlu0 %678, %v561
        %v680 = vpop.permute.xlu0 %679
        %683 = vset.pattern.permute.xlu0 0
        %684 = vperm.xlu0 %683, %v562
        %v685 = vpop.permute.xlu0 %684
        %688 = vset.pattern.permute.xlu0 0
        %689 = vperm.xlu0 %688, %v563
        %v690 = vpop.permute.xlu0 %689
        %v692 = vmul.f32 %v615, %v580
        %v693 = vmul.f32 %v615, %v581
        %v694 = vmul.f32 %v620, %v582
        %v695 = vmul.f32 %v620, %v583
        %v696 = vmul.f32 %v625, %v584
        %v697 = vmul.f32 %v625, %v585
        %v698 = vmul.f32 %v630, %v586
        %v699 = vmul.f32 %v630, %v587
        %v700 = vmul.f32 %v635, %v588
        %v701 = vmul.f32 %v635, %v589
        %v702 = vmul.f32 %v640, %v590
        %v703 = vmul.f32 %v640, %v591
        %v704 = vmul.f32 %v645, %v592
        %v705 = vmul.f32 %v645, %v593
        %v706 = vmul.f32 %v650, %v594
        %v707 = vmul.f32 %v650, %v595
        %v708 = vmul.f32 %v655, %v596
        %v709 = vmul.f32 %v655, %v597
        %v710 = vmul.f32 %v660, %v598
        %v711 = vmul.f32 %v660, %v599
        %v712 = vmul.f32 %v665, %v600
        %v713 = vmul.f32 %v665, %v601
        %v714 = vmul.f32 %v670, %v602
        %v715 = vmul.f32 %v670, %v603
        %v716 = vmul.f32 %v675, %v604
        %v717 = vmul.f32 %v675, %v605
        %v718 = vmul.f32 %v680, %v606
        %v719 = vmul.f32 %v680, %v607
        %v720 = vmul.f32 %v685, %v608
        %v721 = vmul.f32 %v685, %v609
        %v722 = vmul.f32 %v690, %v610
        %v723 = vmul.f32 %v690, %v611
        %v724 = vadd.f32 %v692, %v694
        %v725 = vadd.f32 %v724, %v696
        %v726 = vadd.f32 %v725, %v698
        %v727 = vadd.f32 %v726, %v700
        %v728 = vadd.f32 %v727, %v702
        %v729 = vadd.f32 %v728, %v704
        %v730 = vadd.f32 %v729, %v706
        %v731 = vadd.f32 %v730, %v708
        %v732 = vadd.f32 %v731, %v710
        %v733 = vadd.f32 %v732, %v712
        %v734 = vadd.f32 %v733, %v714
        %v735 = vadd.f32 %v734, %v716
        %v736 = vadd.f32 %v735, %v718
        %v737 = vadd.f32 %v736, %v720
        %v738 = vadd.f32 %v737, %v722
        %v739 = vrot.slane %v738, 4
        %v740 = vadd.f32 %v738, %v739
        %v741 = vrot.slane %v740, 2
        %v742 = vadd.f32 %v740, %v741
        %v743 = vrot.slane %v742, 1
        %v744 = vadd.f32 %v742, %v743
        %v745 = vadd.f32 %v693, %v695
        %v746 = vadd.f32 %v745, %v697
        %v747 = vadd.f32 %v746, %v699
        %v748 = vadd.f32 %v747, %v701
        %v749 = vadd.f32 %v748, %v703
        %v750 = vadd.f32 %v749, %v705
        %v751 = vadd.f32 %v750, %v707
        %v752 = vadd.f32 %v751, %v709
        %v753 = vadd.f32 %v752, %v711
        %v754 = vadd.f32 %v753, %v713
        %v755 = vadd.f32 %v754, %v715
        %v756 = vadd.f32 %v755, %v717
        %v757 = vadd.f32 %v756, %v719
        %v758 = vadd.f32 %v757, %v721
        %v759 = vadd.f32 %v758, %v723
        %v760 = vrot.slane %v759, 4
        %v761 = vadd.f32 %v759, %v760
        %v762 = vrot.slane %v761, 2
        %v763 = vadd.f32 %v761, %v762
        %v764 = vrot.slane %v763, 1
        %v765 = vadd.f32 %v763, %v764
        %v768 = vcombine.low %v744, %v765
        %v770 = vunpack.c.l.s4 1966171168
        %v771 = vunpack.c.0.s8 %v770
        %v772 = vlaneseq
        %v773 = vshrl.u32 %v772, 7
        %v774 = vsub.s32 %v771, %v773
        %v775 = vrot.slane %v768, %v774
        %v777 = vunpack.c.l.s4 1966171168
        %v778 = vunpack.c.0.s8 %v777
        %v779 = vlaneseq
        %v780 = vshrl.u32 %v779, 7
        %v781 = vsub.s32 %v778, %v780
        %v782 = vrot.slane %v775, %v781
        %v784 = vlaneseq
        %vm785 = vcmp.ge.s32.totalorder %v784, 0
        %vm786 = vcmp.lt.s32.totalorder %v784, 256
        %vm787 = vmand %vm785, %vm786
        %788 = vst.msk [vmem:[%s306] ss:$8 sm:$0x3] %vm787, %v782
        %789 = vst.msk [vmem:[%s306] ss:$8 sm:$0x0] %vm787, %v782
        %s790 = scalar_lea.vmem %s334, 128
        %v791 = vld [vmem:[%s790] sm:$0xff]
        %v792 = vld [vmem:[%s790 + $0x8] sm:$0xff]
        %v793 = vld [vmem:[%s790 + $0x10] sm:$0xff]
        %v794 = vld [vmem:[%s790 + $0x18] sm:$0xff]
        %v795 = vld [vmem:[%s790 + $0x20] sm:$0xff]
        %v796 = vld [vmem:[%s790 + $0x28] sm:$0xff]
        %v797 = vld [vmem:[%s790 + $0x30] sm:$0xff]
        %v798 = vld [vmem:[%s790 + $0x38] sm:$0xff]
        %v799 = vld [vmem:[%s790 + $0x40] sm:$0xff]
        %v800 = vld [vmem:[%s790 + $0x48] sm:$0xff]
        %v801 = vld [vmem:[%s790 + $0x50] sm:$0xff]
        %v802 = vld [vmem:[%s790 + $0x58] sm:$0xff]
        %v803 = vld [vmem:[%s790 + $0x60] sm:$0xff]
        %v804 = vld [vmem:[%s790 + $0x68] sm:$0xff]
        %v805 = vld [vmem:[%s790 + $0x70] sm:$0xff]
        %v806 = vld [vmem:[%s790 + $0x78] sm:$0xff]
        %v807 = vunpack.c.l.bf16 %v791
        %v808 = vunpack.c.h.bf16 %v791
        %v809 = vunpack.c.l.bf16 %v792
        %v810 = vunpack.c.h.bf16 %v792
        %v811 = vunpack.c.l.bf16 %v793
        %v812 = vunpack.c.h.bf16 %v793
        %v813 = vunpack.c.l.bf16 %v794
        %v814 = vunpack.c.h.bf16 %v794
        %v815 = vunpack.c.l.bf16 %v795
        %v816 = vunpack.c.h.bf16 %v795
        %v817 = vunpack.c.l.bf16 %v796
        %v818 = vunpack.c.h.bf16 %v796
        %v819 = vunpack.c.l.bf16 %v797
        %v820 = vunpack.c.h.bf16 %v797
        %v821 = vunpack.c.l.bf16 %v798
        %v822 = vunpack.c.h.bf16 %v798
        %v823 = vunpack.c.l.bf16 %v799
        %v824 = vunpack.c.h.bf16 %v799
        %v825 = vunpack.c.l.bf16 %v800
        %v826 = vunpack.c.h.bf16 %v800
        %v827 = vunpack.c.l.bf16 %v801
        %v828 = vunpack.c.h.bf16 %v801
        %v829 = vunpack.c.l.bf16 %v802
        %v830 = vunpack.c.h.bf16 %v802
        %v831 = vunpack.c.l.bf16 %v803
        %v832 = vunpack.c.h.bf16 %v803
        %v833 = vunpack.c.l.bf16 %v804
        %v834 = vunpack.c.h.bf16 %v804
        %v835 = vunpack.c.l.bf16 %v805
        %v836 = vunpack.c.h.bf16 %v805
        %v837 = vunpack.c.l.bf16 %v806
        %v838 = vunpack.c.h.bf16 %v806
        %839 = vset.pattern.permute.xlu0 1
        %840 = vperm.xlu0 %839, %v548
        %v841 = vpop.permute.xlu0 %840
        %843 = vset.pattern.permute.xlu0 1
        %844 = vperm.xlu0 %843, %v549
        %v845 = vpop.permute.xlu0 %844
        %847 = vset.pattern.permute.xlu0 1
        %848 = vperm.xlu0 %847, %v550
        %v849 = vpop.permute.xlu0 %848
        %851 = vset.pattern.permute.xlu0 1
        %852 = vperm.xlu0 %851, %v551
        %v853 = vpop.permute.xlu0 %852
        %855 = vset.pattern.permute.xlu0 1
        %856 = vperm.xlu0 %855, %v552
        %v857 = vpop.permute.xlu0 %856
        %859 = vset.pattern.permute.xlu0 1
        %860 = vperm.xlu0 %859, %v553
        %v861 = vpop.permute.xlu0 %860
        %863 = vset.pattern.permute.xlu0 1
        %864 = vperm.xlu0 %863, %v554
        %v865 = vpop.permute.xlu0 %864
        %867 = vset.pattern.permute.xlu0 1
        %868 = vperm.xlu0 %867, %v555
        %v869 = vpop.permute.xlu0 %868
        %871 = vset.pattern.permute.xlu0 1
        %872 = vperm.xlu0 %871, %v556
        %v873 = vpop.permute.xlu0 %872
        %875 = vset.pattern.permute.xlu0 1
        %876 = vperm.xlu0 %875, %v557
        %v877 = vpop.permute.xlu0 %876
        %879 = vset.pattern.permute.xlu0 1
        %880 = vperm.xlu0 %879, %v558
        %v881 = vpop.permute.xlu0 %880
        %883 = vset.pattern.permute.xlu0 1
        %884 = vperm.xlu0 %883, %v559
        %v885 = vpop.permute.xlu0 %884
        %887 = vset.pattern.permute.xlu0 1
        %888 = vperm.xlu0 %887, %v560
        %v889 = vpop.permute.xlu0 %888
        %891 = vset.pattern.permute.xlu0 1
        %892 = vperm.xlu0 %891, %v561
        %v893 = vpop.permute.xlu0 %892
        %895 = vset.pattern.permute.xlu0 1
        %896 = vperm.xlu0 %895, %v562
        %v897 = vpop.permute.xlu0 %896
        %899 = vset.pattern.permute.xlu0 1
        %900 = vperm.xlu0 %899, %v563
        %v901 = vpop.permute.xlu0 %900
        %v903 = vmul.f32 %v841, %v807
        %v904 = vmul.f32 %v841, %v808
        %v905 = vmul.f32 %v845, %v809
        %v906 = vmul.f32 %v845, %v810
        %v907 = vmul.f32 %v849, %v811
        %v908 = vmul.f32 %v849, %v812
        %v909 = vmul.f32 %v853, %v813
        %v910 = vmul.f32 %v853, %v814
        %v911 = vmul.f32 %v857, %v815
        %v912 = vmul.f32 %v857, %v816
        %v913 = vmul.f32 %v861, %v817
        %v914 = vmul.f32 %v861, %v818
        %v915 = vmul.f32 %v865, %v819
        %v916 = vmul.f32 %v865, %v820
        %v917 = vmul.f32 %v869, %v821
        %v918 = vmul.f32 %v869, %v822
        %v919 = vmul.f32 %v873, %v823
        %v920 = vmul.f32 %v873, %v824
        %v921 = vmul.f32 %v877, %v825
        %v922 = vmul.f32 %v877, %v826
        %v923 = vmul.f32 %v881, %v827
        %v924 = vmul.f32 %v881, %v828
        %v925 = vmul.f32 %v885, %v829
        %v926 = vmul.f32 %v885, %v830
        %v927 = vmul.f32 %v889, %v831
        %v928 = vmul.f32 %v889, %v832
        %v929 = vmul.f32 %v893, %v833
        %v930 = vmul.f32 %v893, %v834
        %v931 = vmul.f32 %v897, %v835
        %v932 = vmul.f32 %v897, %v836
        %v933 = vmul.f32 %v901, %v837
        %v934 = vmul.f32 %v901, %v838
        %v935 = vadd.f32 %v903, %v905
        %v936 = vadd.f32 %v935, %v907
        %v937 = vadd.f32 %v936, %v909
        %v938 = vadd.f32 %v937, %v911
        %v939 = vadd.f32 %v938, %v913
        %v940 = vadd.f32 %v939, %v915
        %v941 = vadd.f32 %v940, %v917
        %v942 = vadd.f32 %v941, %v919
        %v943 = vadd.f32 %v942, %v921
        %v944 = vadd.f32 %v943, %v923
        %v945 = vadd.f32 %v944, %v925
        %v946 = vadd.f32 %v945, %v927
        %v947 = vadd.f32 %v946, %v929
        %v948 = vadd.f32 %v947, %v931
        %v949 = vadd.f32 %v948, %v933
        %v950 = vrot.slane %v949, 4
        %v951 = vadd.f32 %v949, %v950
        %v952 = vrot.slane %v951, 2
        %v953 = vadd.f32 %v951, %v952
        %v954 = vrot.slane %v953, 1
        %v955 = vadd.f32 %v953, %v954
        %v956 = vadd.f32 %v904, %v906
        %v957 = vadd.f32 %v956, %v908
        %v958 = vadd.f32 %v957, %v910
        %v959 = vadd.f32 %v958, %v912
        %v960 = vadd.f32 %v959, %v914
        %v961 = vadd.f32 %v960, %v916
        %v962 = vadd.f32 %v961, %v918
        %v963 = vadd.f32 %v962, %v920
        %v964 = vadd.f32 %v963, %v922
        %v965 = vadd.f32 %v964, %v924
        %v966 = vadd.f32 %v965, %v926
        %v967 = vadd.f32 %v966, %v928
        %v968 = vadd.f32 %v967, %v930
        %v969 = vadd.f32 %v968, %v932
        %v970 = vadd.f32 %v969, %v934
        %v971 = vrot.slane %v970, 4
        %v972 = vadd.f32 %v970, %v971
        %v973 = vrot.slane %v972, 2
        %v974 = vadd.f32 %v972, %v973
        %v975 = vrot.slane %v974, 1
        %v976 = vadd.f32 %v974, %v975
        %v979 = vcombine.low %v955, %v976
        %v981 = vunpack.c.l.s4 1966171168
        %v982 = vunpack.c.0.s8 %v981
        %v983 = vlaneseq
        %v984 = vshrl.u32 %v983, 7
        %v985 = vsub.s32 %v982, %v984
        %v986 = vrot.slane %v979, %v985
        %v988 = vunpack.c.l.s4 1966171168
        %v989 = vunpack.c.0.s8 %v988
        %v990 = vlaneseq
        %v991 = vshrl.u32 %v990, 7
        %v992 = vsub.s32 %v989, %v991
        %v993 = vrot.slane %v986, %v992
        %s995 = scalar_lea.vmem %s306, 1 [#allocation2]
        %996 = vst.msk [vmem:[%s995] ss:$8 sm:$0x3] %vm787, %v993
        %997 = vst.msk [vmem:[%s995] ss:$8 sm:$0x0] %vm787, %v993
        %s998 = scalar_lea.vmem %s334, 256
        %v999 = vld [vmem:[%s998] sm:$0xff]
        %v1000 = vld [vmem:[%s998 + $0x8] sm:$0xff]
        %v1001 = vld [vmem:[%s998 + $0x10] sm:$0xff]
        %v1002 = vld [vmem:[%s998 + $0x18] sm:$0xff]
        %v1003 = vld [vmem:[%s998 + $0x20] sm:$0xff]
        %v1004 = vld [vmem:[%s998 + $0x28] sm:$0xff]
        %v1005 = vld [vmem:[%s998 + $0x30] sm:$0xff]
        %v1006 = vld [vmem:[%s998 + $0x38] sm:$0xff]
        %v1007 = vld [vmem:[%s998 + $0x40] sm:$0xff]
        %v1008 = vld [vmem:[%s998 + $0x48] sm:$0xff]
        %v1009 = vld [vmem:[%s998 + $0x50] sm:$0xff]
        %v1010 = vld [vmem:[%s998 + $0x58] sm:$0xff]
        %v1011 = vld [vmem:[%s998 + $0x60] sm:$0xff]
        %v1012 = vld [vmem:[%s998 + $0x68] sm:$0xff]
        %v1013 = vld [vmem:[%s998 + $0x70] sm:$0xff]
        %v1014 = vld [vmem:[%s998 + $0x78] sm:$0xff]
        %v1015 = vunpack.c.l.bf16 %v999
        %v1016 = vunpack.c.h.bf16 %v999
        %v1017 = vunpack.c.l.bf16 %v1000
        %v1018 = vunpack.c.h.bf16 %v1000
        %v1019 = vunpack.c.l.bf16 %v1001
        %v1020 = vunpack.c.h.bf16 %v1001
        %v1021 = vunpack.c.l.bf16 %v1002
        %v1022 = vunpack.c.h.bf16 %v1002
        %v1023 = vunpack.c.l.bf16 %v1003
        %v1024 = vunpack.c.h.bf16 %v1003
        %v1025 = vunpack.c.l.bf16 %v1004
        %v1026 = vunpack.c.h.bf16 %v1004
        %v1027 = vunpack.c.l.bf16 %v1005
        %v1028 = vunpack.c.h.bf16 %v1005
        %v1029 = vunpack.c.l.bf16 %v1006
        %v1030 = vunpack.c.h.bf16 %v1006
        %v1031 = vunpack.c.l.bf16 %v1007
        %v1032 = vunpack.c.h.bf16 %v1007
        %v1033 = vunpack.c.l.bf16 %v1008
        %v1034 = vunpack.c.h.bf16 %v1008
        %v1035 = vunpack.c.l.bf16 %v1009
        %v1036 = vunpack.c.h.bf16 %v1009
        %v1037 = vunpack.c.l.bf16 %v1010
        %v1038 = vunpack.c.h.bf16 %v1010
        %v1039 = vunpack.c.l.bf16 %v1011
        %v1040 = vunpack.c.h.bf16 %v1011
        %v1041 = vunpack.c.l.bf16 %v1012
        %v1042 = vunpack.c.h.bf16 %v1012
        %v1043 = vunpack.c.l.bf16 %v1013
        %v1044 = vunpack.c.h.bf16 %v1013
        %v1045 = vunpack.c.l.bf16 %v1014
        %v1046 = vunpack.c.h.bf16 %v1014
        %1047 = vset.pattern.permute.xlu0 2
        %1048 = vperm.xlu0 %1047, %v548
        %v1049 = vpop.permute.xlu0 %1048
        %1051 = vset.pattern.permute.xlu0 2
        %1052 = vperm.xlu0 %1051, %v549
        %v1053 = vpop.permute.xlu0 %1052
        %1055 = vset.pattern.permute.xlu0 2
        %1056 = vperm.xlu0 %1055, %v550
        %v1057 = vpop.permute.xlu0 %1056
        %1059 = vset.pattern.permute.xlu0 2
        %1060 = vperm.xlu0 %1059, %v551
        %v1061 = vpop.permute.xlu0 %1060
        %1063 = vset.pattern.permute.xlu0 2
        %1064 = vperm.xlu0 %1063, %v552
        %v1065 = vpop.permute.xlu0 %1064
        %1067 = vset.pattern.permute.xlu0 2
        %1068 = vperm.xlu0 %1067, %v553
        %v1069 = vpop.permute.xlu0 %1068
        %1071 = vset.pattern.permute.xlu0 2
        %1072 = vperm.xlu0 %1071, %v554
        %v1073 = vpop.permute.xlu0 %1072
        %1075 = vset.pattern.permute.xlu0 2
        %1076 = vperm.xlu0 %1075, %v555
        %v1077 = vpop.permute.xlu0 %1076
        %1079 = vset.pattern.permute.xlu0 2
        %1080 = vperm.xlu0 %1079, %v556
        %v1081 = vpop.permute.xlu0 %1080
        %1083 = vset.pattern.permute.xlu0 2
        %1084 = vperm.xlu0 %1083, %v557
        %v1085 = vpop.permute.xlu0 %1084
        %1087 = vset.pattern.permute.xlu0 2
        %1088 = vperm.xlu0 %1087, %v558
        %v1089 = vpop.permute.xlu0 %1088
        %1091 = vset.pattern.permute.xlu0 2
        %1092 = vperm.xlu0 %1091, %v559
        %v1093 = vpop.permute.xlu0 %1092
        %1095 = vset.pattern.permute.xlu0 2
        %1096 = vperm.xlu0 %1095, %v560
        %v1097 = vpop.permute.xlu0 %1096
        %1099 = vset.pattern.permute.xlu0 2
        %1100 = vperm.xlu0 %1099, %v561
        %v1101 = vpop.permute.xlu0 %1100
        %1103 = vset.pattern.permute.xlu0 2
        %1104 = vperm.xlu0 %1103, %v562
        %v1105 = vpop.permute.xlu0 %1104
        %1107 = vset.pattern.permute.xlu0 2
        %1108 = vperm.xlu0 %1107, %v563
        %v1109 = vpop.permute.xlu0 %1108
        %v1111 = vmul.f32 %v1049, %v1015
        %v1112 = vmul.f32 %v1049, %v1016
        %v1113 = vmul.f32 %v1053, %v1017
        %v1114 = vmul.f32 %v1053, %v1018
        %v1115 = vmul.f32 %v1057, %v1019
        %v1116 = vmul.f32 %v1057, %v1020
        %v1117 = vmul.f32 %v1061, %v1021
        %v1118 = vmul.f32 %v1061, %v1022
        %v1119 = vmul.f32 %v1065, %v1023
        %v1120 = vmul.f32 %v1065, %v1024
        %v1121 = vmul.f32 %v1069, %v1025
        %v1122 = vmul.f32 %v1069, %v1026
        %v1123 = vmul.f32 %v1073, %v1027
        %v1124 = vmul.f32 %v1073, %v1028
        %v1125 = vmul.f32 %v1077, %v1029
        %v1126 = vmul.f32 %v1077, %v1030
        %v1127 = vmul.f32 %v1081, %v1031
        %v1128 = vmul.f32 %v1081, %v1032
        %v1129 = vmul.f32 %v1085, %v1033
        %v1130 = vmul.f32 %v1085, %v1034
        %v1131 = vmul.f32 %v1089, %v1035
        %v1132 = vmul.f32 %v1089, %v1036
        %v1133 = vmul.f32 %v1093, %v1037
        %v1134 = vmul.f32 %v1093, %v1038
        %v1135 = vmul.f32 %v1097, %v1039
        %v1136 = vmul.f32 %v1097, %v1040
        %v1137 = vmul.f32 %v1101, %v1041
        %v1138 = vmul.f32 %v1101, %v1042
        %v1139 = vmul.f32 %v1105, %v1043
        %v1140 = vmul.f32 %v1105, %v1044
        %v1141 = vmul.f32 %v1109, %v1045
        %v1142 = vmul.f32 %v1109, %v1046
        %v1143 = vadd.f32 %v1111, %v1113
        %v1144 = vadd.f32 %v1143, %v1115
        %v1145 = vadd.f32 %v1144, %v1117
        %v1146 = vadd.f32 %v1145, %v1119
        %v1147 = vadd.f32 %v1146, %v1121
        %v1148 = vadd.f32 %v1147, %v1123
        %v1149 = vadd.f32 %v1148, %v1125
        %v1150 = vadd.f32 %v1149, %v1127
        %v1151 = vadd.f32 %v1150, %v1129
        %v1152 = vadd.f32 %v1151, %v1131
        %v1153 = vadd.f32 %v1152, %v1133
        %v1154 = vadd.f32 %v1153, %v1135
        %v1155 = vadd.f32 %v1154, %v1137
        %v1156 = vadd.f32 %v1155, %v1139
        %v1157 = vadd.f32 %v1156, %v1141
        %v1158 = vrot.slane %v1157, 4
        %v1159 = vadd.f32 %v1157, %v1158
        %v1160 = vrot.slane %v1159, 2
        %v1161 = vadd.f32 %v1159, %v1160
        %v1162 = vrot.slane %v1161, 1
        %v1163 = vadd.f32 %v1161, %v1162
        %v1164 = vadd.f32 %v1112, %v1114
        %v1165 = vadd.f32 %v1164, %v1116
        %v1166 = vadd.f32 %v1165, %v1118
        %v1167 = vadd.f32 %v1166, %v1120
        %v1168 = vadd.f32 %v1167, %v1122
        %v1169 = vadd.f32 %v1168, %v1124
        %v1170 = vadd.f32 %v1169, %v1126
        %v1171 = vadd.f32 %v1170, %v1128
        %v1172 = vadd.f32 %v1171, %v1130
        %v1173 = vadd.f32 %v1172, %v1132
        %v1174 = vadd.f32 %v1173, %v1134
        %v1175 = vadd.f32 %v1174, %v1136
        %v1176 = vadd.f32 %v1175, %v1138
        %v1177 = vadd.f32 %v1176, %v1140
        %v1178 = vadd.f32 %v1177, %v1142
        %v1179 = vrot.slane %v1178, 4
        %v1180 = vadd.f32 %v1178, %v1179
        %v1181 = vrot.slane %v1180, 2
        %v1182 = vadd.f32 %v1180, %v1181
        %v1183 = vrot.slane %v1182, 1
        %v1184 = vadd.f32 %v1182, %v1183
        %v1187 = vcombine.low %v1163, %v1184
        %v1189 = vunpack.c.l.s4 1966171168
        %v1190 = vunpack.c.0.s8 %v1189
        %v1191 = vlaneseq
        %v1192 = vshrl.u32 %v1191, 7
        %v1193 = vsub.s32 %v1190, %v1192
        %v1194 = vrot.slane %v1187, %v1193
        %v1196 = vunpack.c.l.s4 1966171168
        %v1197 = vunpack.c.0.s8 %v1196
        %v1198 = vlaneseq
        %v1199 = vshrl.u32 %v1198, 7
        %v1200 = vsub.s32 %v1197, %v1199
        %v1201 = vrot.slane %v1194, %v1200
        %s1203 = scalar_lea.vmem %s306, 2 [#allocation2]
        %1204 = vst.msk [vmem:[%s1203] ss:$8 sm:$0x3] %vm787, %v1201
        %1205 = vst.msk [vmem:[%s1203] ss:$8 sm:$0x0] %vm787, %v1201
        %s1206 = scalar_lea.vmem %s334, 384
        %v1207 = vld [vmem:[%s1206] sm:$0xff]
        %v1208 = vld [vmem:[%s1206 + $0x8] sm:$0xff]
        %v1209 = vld [vmem:[%s1206 + $0x10] sm:$0xff]
        %v1210 = vld [vmem:[%s1206 + $0x18] sm:$0xff]
        %v1211 = vld [vmem:[%s1206 + $0x20] sm:$0xff]
        %v1212 = vld [vmem:[%s1206 + $0x28] sm:$0xff]
        %v1213 = vld [vmem:[%s1206 + $0x30] sm:$0xff]
        %v1214 = vld [vmem:[%s1206 + $0x38] sm:$0xff]
        %v1215 = vld [vmem:[%s1206 + $0x40] sm:$0xff]
        %v1216 = vld [vmem:[%s1206 + $0x48] sm:$0xff]
        %v1217 = vld [vmem:[%s1206 + $0x50] sm:$0xff]
        %v1218 = vld [vmem:[%s1206 + $0x58] sm:$0xff]
        %v1219 = vld [vmem:[%s1206 + $0x60] sm:$0xff]
        %v1220 = vld [vmem:[%s1206 + $0x68] sm:$0xff]
        %v1221 = vld [vmem:[%s1206 + $0x70] sm:$0xff]
        %v1222 = vld [vmem:[%s1206 + $0x78] sm:$0xff]
        %v1223 = vunpack.c.l.bf16 %v1207
        %v1224 = vunpack.c.h.bf16 %v1207
        %v1225 = vunpack.c.l.bf16 %v1208
        %v1226 = vunpack.c.h.bf16 %v1208
        %v1227 = vunpack.c.l.bf16 %v1209
        %v1228 = vunpack.c.h.bf16 %v1209
        %v1229 = vunpack.c.l.bf16 %v1210
        %v1230 = vunpack.c.h.bf16 %v1210
        %v1231 = vunpack.c.l.bf16 %v1211
        %v1232 = vunpack.c.h.bf16 %v1211
        %v1233 = vunpack.c.l.bf16 %v1212
        %v1234 = vunpack.c.h.bf16 %v1212
        %v1235 = vunpack.c.l.bf16 %v1213
        %v1236 = vunpack.c.h.bf16 %v1213
        %v1237 = vunpack.c.l.bf16 %v1214
        %v1238 = vunpack.c.h.bf16 %v1214
        %v1239 = vunpack.c.l.bf16 %v1215
        %v1240 = vunpack.c.h.bf16 %v1215
        %v1241 = vunpack.c.l.bf16 %v1216
        %v1242 = vunpack.c.h.bf16 %v1216
        %v1243 = vunpack.c.l.bf16 %v1217
        %v1244 = vunpack.c.h.bf16 %v1217
        %v1245 = vunpack.c.l.bf16 %v1218
        %v1246 = vunpack.c.h.bf16 %v1218
        %v1247 = vunpack.c.l.bf16 %v1219
        %v1248 = vunpack.c.h.bf16 %v1219
        %v1249 = vunpack.c.l.bf16 %v1220
        %v1250 = vunpack.c.h.bf16 %v1220
        %v1251 = vunpack.c.l.bf16 %v1221
        %v1252 = vunpack.c.h.bf16 %v1221
        %v1253 = vunpack.c.l.bf16 %v1222
        %v1254 = vunpack.c.h.bf16 %v1222
        %1255 = vset.pattern.permute.xlu0 3
        %1256 = vperm.xlu0 %1255, %v548
        %v1257 = vpop.permute.xlu0 %1256
        %1259 = vset.pattern.permute.xlu0 3
        %1260 = vperm.xlu0 %1259, %v549
        %v1261 = vpop.permute.xlu0 %1260
        %1263 = vset.pattern.permute.xlu0 3
        %1264 = vperm.xlu0 %1263, %v550
        %v1265 = vpop.permute.xlu0 %1264
        %1267 = vset.pattern.permute.xlu0 3
        %1268 = vperm.xlu0 %1267, %v551
        %v1269 = vpop.permute.xlu0 %1268
        %1271 = vset.pattern.permute.xlu0 3
        %1272 = vperm.xlu0 %1271, %v552
        %v1273 = vpop.permute.xlu0 %1272
        %1275 = vset.pattern.permute.xlu0 3
        %1276 = vperm.xlu0 %1275, %v553
        %v1277 = vpop.permute.xlu0 %1276
        %1279 = vset.pattern.permute.xlu0 3
        %1280 = vperm.xlu0 %1279, %v554
        %v1281 = vpop.permute.xlu0 %1280
        %1283 = vset.pattern.permute.xlu0 3
        %1284 = vperm.xlu0 %1283, %v555
        %v1285 = vpop.permute.xlu0 %1284
        %1287 = vset.pattern.permute.xlu0 3
        %1288 = vperm.xlu0 %1287, %v556
        %v1289 = vpop.permute.xlu0 %1288
        %1291 = vset.pattern.permute.xlu0 3
        %1292 = vperm.xlu0 %1291, %v557
        %v1293 = vpop.permute.xlu0 %1292
        %1295 = vset.pattern.permute.xlu0 3
        %1296 = vperm.xlu0 %1295, %v558
        %v1297 = vpop.permute.xlu0 %1296
        %1299 = vset.pattern.permute.xlu0 3
        %1300 = vperm.xlu0 %1299, %v559
        %v1301 = vpop.permute.xlu0 %1300
        %1303 = vset.pattern.permute.xlu0 3
        %1304 = vperm.xlu0 %1303, %v560
        %v1305 = vpop.permute.xlu0 %1304
        %1307 = vset.pattern.permute.xlu0 3
        %1308 = vperm.xlu0 %1307, %v561
        %v1309 = vpop.permute.xlu0 %1308
        %1311 = vset.pattern.permute.xlu0 3
        %1312 = vperm.xlu0 %1311, %v562
        %v1313 = vpop.permute.xlu0 %1312
        %1315 = vset.pattern.permute.xlu0 3
        %1316 = vperm.xlu0 %1315, %v563
        %v1317 = vpop.permute.xlu0 %1316
        %v1319 = vmul.f32 %v1257, %v1223
        %v1320 = vmul.f32 %v1257, %v1224
        %v1321 = vmul.f32 %v1261, %v1225
        %v1322 = vmul.f32 %v1261, %v1226
        %v1323 = vmul.f32 %v1265, %v1227
        %v1324 = vmul.f32 %v1265, %v1228
        %v1325 = vmul.f32 %v1269, %v1229
        %v1326 = vmul.f32 %v1269, %v1230
        %v1327 = vmul.f32 %v1273, %v1231
        %v1328 = vmul.f32 %v1273, %v1232
        %v1329 = vmul.f32 %v1277, %v1233
        %v1330 = vmul.f32 %v1277, %v1234
        %v1331 = vmul.f32 %v1281, %v1235
        %v1332 = vmul.f32 %v1281, %v1236
        %v1333 = vmul.f32 %v1285, %v1237
        %v1334 = vmul.f32 %v1285, %v1238
        %v1335 = vmul.f32 %v1289, %v1239
        %v1336 = vmul.f32 %v1289, %v1240
        %v1337 = vmul.f32 %v1293, %v1241
        %v1338 = vmul.f32 %v1293, %v1242
        %v1339 = vmul.f32 %v1297, %v1243
        %v1340 = vmul.f32 %v1297, %v1244
        %v1341 = vmul.f32 %v1301, %v1245
        %v1342 = vmul.f32 %v1301, %v1246
        %v1343 = vmul.f32 %v1305, %v1247
        %v1344 = vmul.f32 %v1305, %v1248
        %v1345 = vmul.f32 %v1309, %v1249
        %v1346 = vmul.f32 %v1309, %v1250
        %v1347 = vmul.f32 %v1313, %v1251
        %v1348 = vmul.f32 %v1313, %v1252
        %v1349 = vmul.f32 %v1317, %v1253
        %v1350 = vmul.f32 %v1317, %v1254
        %v1351 = vadd.f32 %v1319, %v1321
        %v1352 = vadd.f32 %v1351, %v1323
        %v1353 = vadd.f32 %v1352, %v1325
        %v1354 = vadd.f32 %v1353, %v1327
        %v1355 = vadd.f32 %v1354, %v1329
        %v1356 = vadd.f32 %v1355, %v1331
        %v1357 = vadd.f32 %v1356, %v1333
        %v1358 = vadd.f32 %v1357, %v1335
        %v1359 = vadd.f32 %v1358, %v1337
        %v1360 = vadd.f32 %v1359, %v1339
        %v1361 = vadd.f32 %v1360, %v1341
        %v1362 = vadd.f32 %v1361, %v1343
        %v1363 = vadd.f32 %v1362, %v1345
        %v1364 = vadd.f32 %v1363, %v1347
        %v1365 = vadd.f32 %v1364, %v1349
        %v1366 = vrot.slane %v1365, 4
        %v1367 = vadd.f32 %v1365, %v1366
        %v1368 = vrot.slane %v1367, 2
        %v1369 = vadd.f32 %v1367, %v1368
        %v1370 = vrot.slane %v1369, 1
        %v1371 = vadd.f32 %v1369, %v1370
        %v1372 = vadd.f32 %v1320, %v1322
        %v1373 = vadd.f32 %v1372, %v1324
        %v1374 = vadd.f32 %v1373, %v1326
        %v1375 = vadd.f32 %v1374, %v1328
        %v1376 = vadd.f32 %v1375, %v1330
        %v1377 = vadd.f32 %v1376, %v1332
        %v1378 = vadd.f32 %v1377, %v1334
        %v1379 = vadd.f32 %v1378, %v1336
        %v1380 = vadd.f32 %v1379, %v1338
        %v1381 = vadd.f32 %v1380, %v1340
        %v1382 = vadd.f32 %v1381, %v1342
        %v1383 = vadd.f32 %v1382, %v1344
        %v1384 = vadd.f32 %v1383, %v1346
        %v1385 = vadd.f32 %v1384, %v1348
        %v1386 = vadd.f32 %v1385, %v1350
        %v1387 = vrot.slane %v1386, 4
        %v1388 = vadd.f32 %v1386, %v1387
        %v1389 = vrot.slane %v1388, 2
        %v1390 = vadd.f32 %v1388, %v1389
        %v1391 = vrot.slane %v1390, 1
        %v1392 = vadd.f32 %v1390, %v1391
        %v1395 = vcombine.low %v1371, %v1392
        %v1397 = vunpack.c.l.s4 1966171168
        %v1398 = vunpack.c.0.s8 %v1397
        %v1399 = vlaneseq
        %v1400 = vshrl.u32 %v1399, 7
        %v1401 = vsub.s32 %v1398, %v1400
        %v1402 = vrot.slane %v1395, %v1401
        %v1404 = vunpack.c.l.s4 1966171168
        %v1405 = vunpack.c.0.s8 %v1404
        %v1406 = vlaneseq
        %v1407 = vshrl.u32 %v1406, 7
        %v1408 = vsub.s32 %v1405, %v1407
        %v1409 = vrot.slane %v1402, %v1408
        %s1411 = scalar_lea.vmem %s306, 3 [#allocation2]
        %1412 = vst.msk [vmem:[%s1411] ss:$8 sm:$0x3] %vm787, %v1409
        %1413 = vst.msk [vmem:[%s1411] ss:$8 sm:$0x0] %vm787, %v1409
        %s1414 = scalar_lea.vmem %s334, 512
        %v1415 = vld [vmem:[%s1414] sm:$0xff]
        %v1416 = vld [vmem:[%s1414 + $0x8] sm:$0xff]
        %v1417 = vld [vmem:[%s1414 + $0x10] sm:$0xff]
        %v1418 = vld [vmem:[%s1414 + $0x18] sm:$0xff]
        %v1419 = vld [vmem:[%s1414 + $0x20] sm:$0xff]
        %v1420 = vld [vmem:[%s1414 + $0x28] sm:$0xff]
        %v1421 = vld [vmem:[%s1414 + $0x30] sm:$0xff]
        %v1422 = vld [vmem:[%s1414 + $0x38] sm:$0xff]
        %v1423 = vld [vmem:[%s1414 + $0x40] sm:$0xff]
        %v1424 = vld [vmem:[%s1414 + $0x48] sm:$0xff]
        %v1425 = vld [vmem:[%s1414 + $0x50] sm:$0xff]
        %v1426 = vld [vmem:[%s1414 + $0x58] sm:$0xff]
        %v1427 = vld [vmem:[%s1414 + $0x60] sm:$0xff]
        %v1428 = vld [vmem:[%s1414 + $0x68] sm:$0xff]
        %v1429 = vld [vmem:[%s1414 + $0x70] sm:$0xff]
        %v1430 = vld [vmem:[%s1414 + $0x78] sm:$0xff]
        %v1431 = vunpack.c.l.bf16 %v1415
        %v1432 = vunpack.c.h.bf16 %v1415
        %v1433 = vunpack.c.l.bf16 %v1416
        %v1434 = vunpack.c.h.bf16 %v1416
        %v1435 = vunpack.c.l.bf16 %v1417
        %v1436 = vunpack.c.h.bf16 %v1417
        %v1437 = vunpack.c.l.bf16 %v1418
        %v1438 = vunpack.c.h.bf16 %v1418
        %v1439 = vunpack.c.l.bf16 %v1419
        %v1440 = vunpack.c.h.bf16 %v1419
        %v1441 = vunpack.c.l.bf16 %v1420
        %v1442 = vunpack.c.h.bf16 %v1420
        %v1443 = vunpack.c.l.bf16 %v1421
        %v1444 = vunpack.c.h.bf16 %v1421
        %v1445 = vunpack.c.l.bf16 %v1422
        %v1446 = vunpack.c.h.bf16 %v1422
        %v1447 = vunpack.c.l.bf16 %v1423
        %v1448 = vunpack.c.h.bf16 %v1423
        %v1449 = vunpack.c.l.bf16 %v1424
        %v1450 = vunpack.c.h.bf16 %v1424
        %v1451 = vunpack.c.l.bf16 %v1425
        %v1452 = vunpack.c.h.bf16 %v1425
        %v1453 = vunpack.c.l.bf16 %v1426
        %v1454 = vunpack.c.h.bf16 %v1426
        %v1455 = vunpack.c.l.bf16 %v1427
        %v1456 = vunpack.c.h.bf16 %v1427
        %v1457 = vunpack.c.l.bf16 %v1428
        %v1458 = vunpack.c.h.bf16 %v1428
        %v1459 = vunpack.c.l.bf16 %v1429
        %v1460 = vunpack.c.h.bf16 %v1429
        %v1461 = vunpack.c.l.bf16 %v1430
        %v1462 = vunpack.c.h.bf16 %v1430
        %1463 = vset.pattern.permute.xlu0 4
        %1464 = vperm.xlu0 %1463, %v548
        %v1465 = vpop.permute.xlu0 %1464
        %1467 = vset.pattern.permute.xlu0 4
        %1468 = vperm.xlu0 %1467, %v549
        %v1469 = vpop.permute.xlu0 %1468
        %1471 = vset.pattern.permute.xlu0 4
        %1472 = vperm.xlu0 %1471, %v550
        %v1473 = vpop.permute.xlu0 %1472
        %1475 = vset.pattern.permute.xlu0 4
        %1476 = vperm.xlu0 %1475, %v551
        %v1477 = vpop.permute.xlu0 %1476
        %1479 = vset.pattern.permute.xlu0 4
        %1480 = vperm.xlu0 %1479, %v552
        %v1481 = vpop.permute.xlu0 %1480
        %1483 = vset.pattern.permute.xlu0 4
        %1484 = vperm.xlu0 %1483, %v553
        %v1485 = vpop.permute.xlu0 %1484
        %1487 = vset.pattern.permute.xlu0 4
        %1488 = vperm.xlu0 %1487, %v554
        %v1489 = vpop.permute.xlu0 %1488
        %1491 = vset.pattern.permute.xlu0 4
        %1492 = vperm.xlu0 %1491, %v555
        %v1493 = vpop.permute.xlu0 %1492
        %1495 = vset.pattern.permute.xlu0 4
        %1496 = vperm.xlu0 %1495, %v556
        %v1497 = vpop.permute.xlu0 %1496
        %1499 = vset.pattern.permute.xlu0 4
        %1500 = vperm.xlu0 %1499, %v557
        %v1501 = vpop.permute.xlu0 %1500
        %1503 = vset.pattern.permute.xlu0 4
        %1504 = vperm.xlu0 %1503, %v558
        %v1505 = vpop.permute.xlu0 %1504
        %1507 = vset.pattern.permute.xlu0 4
        %1508 = vperm.xlu0 %1507, %v559
        %v1509 = vpop.permute.xlu0 %1508
        %1511 = vset.pattern.permute.xlu0 4
        %1512 = vperm.xlu0 %1511, %v560
        %v1513 = vpop.permute.xlu0 %1512
        %1515 = vset.pattern.permute.xlu0 4
        %1516 = vperm.xlu0 %1515, %v561
        %v1517 = vpop.permute.xlu0 %1516
        %1519 = vset.pattern.permute.xlu0 4
        %1520 = vperm.xlu0 %1519, %v562
        %v1521 = vpop.permute.xlu0 %1520
        %1523 = vset.pattern.permute.xlu0 4
        %1524 = vperm.xlu0 %1523, %v563
        %v1525 = vpop.permute.xlu0 %1524
        %v1527 = vmul.f32 %v1465, %v1431
        %v1528 = vmul.f32 %v1465, %v1432
        %v1529 = vmul.f32 %v1469, %v1433
        %v1530 = vmul.f32 %v1469, %v1434
        %v1531 = vmul.f32 %v1473, %v1435
        %v1532 = vmul.f32 %v1473, %v1436
        %v1533 = vmul.f32 %v1477, %v1437
        %v1534 = vmul.f32 %v1477, %v1438
        %v1535 = vmul.f32 %v1481, %v1439
        %v1536 = vmul.f32 %v1481, %v1440
        %v1537 = vmul.f32 %v1485, %v1441
        %v1538 = vmul.f32 %v1485, %v1442
        %v1539 = vmul.f32 %v1489, %v1443
        %v1540 = vmul.f32 %v1489, %v1444
        %v1541 = vmul.f32 %v1493, %v1445
        %v1542 = vmul.f32 %v1493, %v1446
        %v1543 = vmul.f32 %v1497, %v1447
        %v1544 = vmul.f32 %v1497, %v1448
        %v1545 = vmul.f32 %v1501, %v1449
        %v1546 = vmul.f32 %v1501, %v1450
        %v1547 = vmul.f32 %v1505, %v1451
        %v1548 = vmul.f32 %v1505, %v1452
        %v1549 = vmul.f32 %v1509, %v1453
        %v1550 = vmul.f32 %v1509, %v1454
        %v1551 = vmul.f32 %v1513, %v1455
        %v1552 = vmul.f32 %v1513, %v1456
        %v1553 = vmul.f32 %v1517, %v1457
        %v1554 = vmul.f32 %v1517, %v1458
        %v1555 = vmul.f32 %v1521, %v1459
        %v1556 = vmul.f32 %v1521, %v1460
        %v1557 = vmul.f32 %v1525, %v1461
        %v1558 = vmul.f32 %v1525, %v1462
        %v1559 = vadd.f32 %v1527, %v1529
        %v1560 = vadd.f32 %v1559, %v1531
        %v1561 = vadd.f32 %v1560, %v1533
        %v1562 = vadd.f32 %v1561, %v1535
        %v1563 = vadd.f32 %v1562, %v1537
        %v1564 = vadd.f32 %v1563, %v1539
        %v1565 = vadd.f32 %v1564, %v1541
        %v1566 = vadd.f32 %v1565, %v1543
        %v1567 = vadd.f32 %v1566, %v1545
        %v1568 = vadd.f32 %v1567, %v1547
        %v1569 = vadd.f32 %v1568, %v1549
        %v1570 = vadd.f32 %v1569, %v1551
        %v1571 = vadd.f32 %v1570, %v1553
        %v1572 = vadd.f32 %v1571, %v1555
        %v1573 = vadd.f32 %v1572, %v1557
        %v1574 = vrot.slane %v1573, 4
        %v1575 = vadd.f32 %v1573, %v1574
        %v1576 = vrot.slane %v1575, 2
        %v1577 = vadd.f32 %v1575, %v1576
        %v1578 = vrot.slane %v1577, 1
        %v1579 = vadd.f32 %v1577, %v1578
        %v1580 = vadd.f32 %v1528, %v1530
        %v1581 = vadd.f32 %v1580, %v1532
        %v1582 = vadd.f32 %v1581, %v1534
        %v1583 = vadd.f32 %v1582, %v1536
        %v1584 = vadd.f32 %v1583, %v1538
        %v1585 = vadd.f32 %v1584, %v1540
        %v1586 = vadd.f32 %v1585, %v1542
        %v1587 = vadd.f32 %v1586, %v1544
        %v1588 = vadd.f32 %v1587, %v1546
        %v1589 = vadd.f32 %v1588, %v1548
        %v1590 = vadd.f32 %v1589, %v1550
        %v1591 = vadd.f32 %v1590, %v1552
        %v1592 = vadd.f32 %v1591, %v1554
        %v1593 = vadd.f32 %v1592, %v1556
        %v1594 = vadd.f32 %v1593, %v1558
        %v1595 = vrot.slane %v1594, 4
        %v1596 = vadd.f32 %v1594, %v1595
        %v1597 = vrot.slane %v1596, 2
        %v1598 = vadd.f32 %v1596, %v1597
        %v1599 = vrot.slane %v1598, 1
        %v1600 = vadd.f32 %v1598, %v1599
        %v1603 = vcombine.low %v1579, %v1600
        %v1605 = vunpack.c.l.s4 1966171168
        %v1606 = vunpack.c.0.s8 %v1605
        %v1607 = vlaneseq
        %v1608 = vshrl.u32 %v1607, 7
        %v1609 = vsub.s32 %v1606, %v1608
        %v1610 = vrot.slane %v1603, %v1609
        %v1612 = vunpack.c.l.s4 1966171168
        %v1613 = vunpack.c.0.s8 %v1612
        %v1614 = vlaneseq
        %v1615 = vshrl.u32 %v1614, 7
        %v1616 = vsub.s32 %v1613, %v1615
        %v1617 = vrot.slane %v1610, %v1616
        %s1619 = scalar_lea.vmem %s306, 4 [#allocation2]
        %1620 = vst.msk [vmem:[%s1619] ss:$8 sm:$0x3] %vm787, %v1617
        %1621 = vst.msk [vmem:[%s1619] ss:$8 sm:$0x0] %vm787, %v1617
        %s1622 = scalar_lea.vmem %s334, 640
        %v1623 = vld [vmem:[%s1622] sm:$0xff]
        %v1624 = vld [vmem:[%s1622 + $0x8] sm:$0xff]
        %v1625 = vld [vmem:[%s1622 + $0x10] sm:$0xff]
        %v1626 = vld [vmem:[%s1622 + $0x18] sm:$0xff]
        %v1627 = vld [vmem:[%s1622 + $0x20] sm:$0xff]
        %v1628 = vld [vmem:[%s1622 + $0x28] sm:$0xff]
        %v1629 = vld [vmem:[%s1622 + $0x30] sm:$0xff]
        %v1630 = vld [vmem:[%s1622 + $0x38] sm:$0xff]
        %v1631 = vld [vmem:[%s1622 + $0x40] sm:$0xff]
        %v1632 = vld [vmem:[%s1622 + $0x48] sm:$0xff]
        %v1633 = vld [vmem:[%s1622 + $0x50] sm:$0xff]
        %v1634 = vld [vmem:[%s1622 + $0x58] sm:$0xff]
        %v1635 = vld [vmem:[%s1622 + $0x60] sm:$0xff]
        %v1636 = vld [vmem:[%s1622 + $0x68] sm:$0xff]
        %v1637 = vld [vmem:[%s1622 + $0x70] sm:$0xff]
        %v1638 = vld [vmem:[%s1622 + $0x78] sm:$0xff]
        %v1639 = vunpack.c.l.bf16 %v1623
        %v1640 = vunpack.c.h.bf16 %v1623
        %v1641 = vunpack.c.l.bf16 %v1624
        %v1642 = vunpack.c.h.bf16 %v1624
        %v1643 = vunpack.c.l.bf16 %v1625
        %v1644 = vunpack.c.h.bf16 %v1625
        %v1645 = vunpack.c.l.bf16 %v1626
        %v1646 = vunpack.c.h.bf16 %v1626
        %v1647 = vunpack.c.l.bf16 %v1627
        %v1648 = vunpack.c.h.bf16 %v1627
        %v1649 = vunpack.c.l.bf16 %v1628
        %v1650 = vunpack.c.h.bf16 %v1628
        %v1651 = vunpack.c.l.bf16 %v1629
        %v1652 = vunpack.c.h.bf16 %v1629
        %v1653 = vunpack.c.l.bf16 %v1630
        %v1654 = vunpack.c.h.bf16 %v1630
        %v1655 = vunpack.c.l.bf16 %v1631
        %v1656 = vunpack.c.h.bf16 %v1631
        %v1657 = vunpack.c.l.bf16 %v1632
        %v1658 = vunpack.c.h.bf16 %v1632
        %v1659 = vunpack.c.l.bf16 %v1633
        %v1660 = vunpack.c.h.bf16 %v1633
        %v1661 = vunpack.c.l.bf16 %v1634
        %v1662 = vunpack.c.h.bf16 %v1634
        %v1663 = vunpack.c.l.bf16 %v1635
        %v1664 = vunpack.c.h.bf16 %v1635
        %v1665 = vunpack.c.l.bf16 %v1636
        %v1666 = vunpack.c.h.bf16 %v1636
        %v1667 = vunpack.c.l.bf16 %v1637
        %v1668 = vunpack.c.h.bf16 %v1637
        %v1669 = vunpack.c.l.bf16 %v1638
        %v1670 = vunpack.c.h.bf16 %v1638
        %1671 = vset.pattern.permute.xlu0 5
        %1672 = vperm.xlu0 %1671, %v548
        %v1673 = vpop.permute.xlu0 %1672
        %1675 = vset.pattern.permute.xlu0 5
        %1676 = vperm.xlu0 %1675, %v549
        %v1677 = vpop.permute.xlu0 %1676
        %1679 = vset.pattern.permute.xlu0 5
        %1680 = vperm.xlu0 %1679, %v550
        %v1681 = vpop.permute.xlu0 %1680
        %1683 = vset.pattern.permute.xlu0 5
        %1684 = vperm.xlu0 %1683, %v551
        %v1685 = vpop.permute.xlu0 %1684
        %1687 = vset.pattern.permute.xlu0 5
        %1688 = vperm.xlu0 %1687, %v552
        %v1689 = vpop.permute.xlu0 %1688
        %1691 = vset.pattern.permute.xlu0 5
        %1692 = vperm.xlu0 %1691, %v553
        %v1693 = vpop.permute.xlu0 %1692
        %1695 = vset.pattern.permute.xlu0 5
        %1696 = vperm.xlu0 %1695, %v554
        %v1697 = vpop.permute.xlu0 %1696
        %1699 = vset.pattern.permute.xlu0 5
        %1700 = vperm.xlu0 %1699, %v555
        %v1701 = vpop.permute.xlu0 %1700
        %1703 = vset.pattern.permute.xlu0 5
        %1704 = vperm.xlu0 %1703, %v556
        %v1705 = vpop.permute.xlu0 %1704
        %1707 = vset.pattern.permute.xlu0 5
        %1708 = vperm.xlu0 %1707, %v557
        %v1709 = vpop.permute.xlu0 %1708
        %1711 = vset.pattern.permute.xlu0 5
        %1712 = vperm.xlu0 %1711, %v558
        %v1713 = vpop.permute.xlu0 %1712
        %1715 = vset.pattern.permute.xlu0 5
        %1716 = vperm.xlu0 %1715, %v559
        %v1717 = vpop.permute.xlu0 %1716
        %1719 = vset.pattern.permute.xlu0 5
        %1720 = vperm.xlu0 %1719, %v560
        %v1721 = vpop.permute.xlu0 %1720
        %1723 = vset.pattern.permute.xlu0 5
        %1724 = vperm.xlu0 %1723, %v561
        %v1725 = vpop.permute.xlu0 %1724
        %1727 = vset.pattern.permute.xlu0 5
        %1728 = vperm.xlu0 %1727, %v562
        %v1729 = vpop.permute.xlu0 %1728
        %1731 = vset.pattern.permute.xlu0 5
        %1732 = vperm.xlu0 %1731, %v563
        %v1733 = vpop.permute.xlu0 %1732
        %v1735 = vmul.f32 %v1673, %v1639
        %v1736 = vmul.f32 %v1673, %v1640
        %v1737 = vmul.f32 %v1677, %v1641
        %v1738 = vmul.f32 %v1677, %v1642
        %v1739 = vmul.f32 %v1681, %v1643
        %v1740 = vmul.f32 %v1681, %v1644
        %v1741 = vmul.f32 %v1685, %v1645
        %v1742 = vmul.f32 %v1685, %v1646
        %v1743 = vmul.f32 %v1689, %v1647
        %v1744 = vmul.f32 %v1689, %v1648
        %v1745 = vmul.f32 %v1693, %v1649
        %v1746 = vmul.f32 %v1693, %v1650
        %v1747 = vmul.f32 %v1697, %v1651
        %v1748 = vmul.f32 %v1697, %v1652
        %v1749 = vmul.f32 %v1701, %v1653
        %v1750 = vmul.f32 %v1701, %v1654
        %v1751 = vmul.f32 %v1705, %v1655
        %v1752 = vmul.f32 %v1705, %v1656
        %v1753 = vmul.f32 %v1709, %v1657
        %v1754 = vmul.f32 %v1709, %v1658
        %v1755 = vmul.f32 %v1713, %v1659
        %v1756 = vmul.f32 %v1713, %v1660
        %v1757 = vmul.f32 %v1717, %v1661
        %v1758 = vmul.f32 %v1717, %v1662
        %v1759 = vmul.f32 %v1721, %v1663
        %v1760 = vmul.f32 %v1721, %v1664
        %v1761 = vmul.f32 %v1725, %v1665
        %v1762 = vmul.f32 %v1725, %v1666
        %v1763 = vmul.f32 %v1729, %v1667
        %v1764 = vmul.f32 %v1729, %v1668
        %v1765 = vmul.f32 %v1733, %v1669
        %v1766 = vmul.f32 %v1733, %v1670
        %v1767 = vadd.f32 %v1735, %v1737
        %v1768 = vadd.f32 %v1767, %v1739
        %v1769 = vadd.f32 %v1768, %v1741
        %v1770 = vadd.f32 %v1769, %v1743
        %v1771 = vadd.f32 %v1770, %v1745
        %v1772 = vadd.f32 %v1771, %v1747
        %v1773 = vadd.f32 %v1772, %v1749
        %v1774 = vadd.f32 %v1773, %v1751
        %v1775 = vadd.f32 %v1774, %v1753
        %v1776 = vadd.f32 %v1775, %v1755
        %v1777 = vadd.f32 %v1776, %v1757
        %v1778 = vadd.f32 %v1777, %v1759
        %v1779 = vadd.f32 %v1778, %v1761
        %v1780 = vadd.f32 %v1779, %v1763
        %v1781 = vadd.f32 %v1780, %v1765
        %v1782 = vrot.slane %v1781, 4
        %v1783 = vadd.f32 %v1781, %v1782
        %v1784 = vrot.slane %v1783, 2
        %v1785 = vadd.f32 %v1783, %v1784
        %v1786 = vrot.slane %v1785, 1
        %v1787 = vadd.f32 %v1785, %v1786
        %v1788 = vadd.f32 %v1736, %v1738
        %v1789 = vadd.f32 %v1788, %v1740
        %v1790 = vadd.f32 %v1789, %v1742
        %v1791 = vadd.f32 %v1790, %v1744
        %v1792 = vadd.f32 %v1791, %v1746
        %v1793 = vadd.f32 %v1792, %v1748
        %v1794 = vadd.f32 %v1793, %v1750
        %v1795 = vadd.f32 %v1794, %v1752
        %v1796 = vadd.f32 %v1795, %v1754
        %v1797 = vadd.f32 %v1796, %v1756
        %v1798 = vadd.f32 %v1797, %v1758
        %v1799 = vadd.f32 %v1798, %v1760
        %v1800 = vadd.f32 %v1799, %v1762
        %v1801 = vadd.f32 %v1800, %v1764
        %v1802 = vadd.f32 %v1801, %v1766
        %v1803 = vrot.slane %v1802, 4
        %v1804 = vadd.f32 %v1802, %v1803
        %v1805 = vrot.slane %v1804, 2
        %v1806 = vadd.f32 %v1804, %v1805
        %v1807 = vrot.slane %v1806, 1
        %v1808 = vadd.f32 %v1806, %v1807
        %v1811 = vcombine.low %v1787, %v1808
        %v1813 = vunpack.c.l.s4 1966171168
        %v1814 = vunpack.c.0.s8 %v1813
        %v1815 = vlaneseq
        %v1816 = vshrl.u32 %v1815, 7
        %v1817 = vsub.s32 %v1814, %v1816
        %v1818 = vrot.slane %v1811, %v1817
        %v1820 = vunpack.c.l.s4 1966171168
        %v1821 = vunpack.c.0.s8 %v1820
        %v1822 = vlaneseq
        %v1823 = vshrl.u32 %v1822, 7
        %v1824 = vsub.s32 %v1821, %v1823
        %v1825 = vrot.slane %v1818, %v1824
        %s1827 = scalar_lea.vmem %s306, 5 [#allocation2]
        %1828 = vst.msk [vmem:[%s1827] ss:$8 sm:$0x3] %vm787, %v1825
        %1829 = vst.msk [vmem:[%s1827] ss:$8 sm:$0x0] %vm787, %v1825
        %s1830 = scalar_lea.vmem %s334, 768
        %v1831 = vld [vmem:[%s1830] sm:$0xff]
        %v1832 = vld [vmem:[%s1830 + $0x8] sm:$0xff]
        %v1833 = vld [vmem:[%s1830 + $0x10] sm:$0xff]
        %v1834 = vld [vmem:[%s1830 + $0x18] sm:$0xff]
        %v1835 = vld [vmem:[%s1830 + $0x20] sm:$0xff]
        %v1836 = vld [vmem:[%s1830 + $0x28] sm:$0xff]
        %v1837 = vld [vmem:[%s1830 + $0x30] sm:$0xff]
        %v1838 = vld [vmem:[%s1830 + $0x38] sm:$0xff]
        %v1839 = vld [vmem:[%s1830 + $0x40] sm:$0xff]
        %v1840 = vld [vmem:[%s1830 + $0x48] sm:$0xff]
        %v1841 = vld [vmem:[%s1830 + $0x50] sm:$0xff]
        %v1842 = vld [vmem:[%s1830 + $0x58] sm:$0xff]
        %v1843 = vld [vmem:[%s1830 + $0x60] sm:$0xff]
        %v1844 = vld [vmem:[%s1830 + $0x68] sm:$0xff]
        %v1845 = vld [vmem:[%s1830 + $0x70] sm:$0xff]
        %v1846 = vld [vmem:[%s1830 + $0x78] sm:$0xff]
        %v1847 = vunpack.c.l.bf16 %v1831
        %v1848 = vunpack.c.h.bf16 %v1831
        %v1849 = vunpack.c.l.bf16 %v1832
        %v1850 = vunpack.c.h.bf16 %v1832
        %v1851 = vunpack.c.l.bf16 %v1833
        %v1852 = vunpack.c.h.bf16 %v1833
        %v1853 = vunpack.c.l.bf16 %v1834
        %v1854 = vunpack.c.h.bf16 %v1834
        %v1855 = vunpack.c.l.bf16 %v1835
        %v1856 = vunpack.c.h.bf16 %v1835
        %v1857 = vunpack.c.l.bf16 %v1836
        %v1858 = vunpack.c.h.bf16 %v1836
        %v1859 = vunpack.c.l.bf16 %v1837
        %v1860 = vunpack.c.h.bf16 %v1837
        %v1861 = vunpack.c.l.bf16 %v1838
        %v1862 = vunpack.c.h.bf16 %v1838
        %v1863 = vunpack.c.l.bf16 %v1839
        %v1864 = vunpack.c.h.bf16 %v1839
        %v1865 = vunpack.c.l.bf16 %v1840
        %v1866 = vunpack.c.h.bf16 %v1840
        %v1867 = vunpack.c.l.bf16 %v1841
        %v1868 = vunpack.c.h.bf16 %v1841
        %v1869 = vunpack.c.l.bf16 %v1842
        %v1870 = vunpack.c.h.bf16 %v1842
        %v1871 = vunpack.c.l.bf16 %v1843
        %v1872 = vunpack.c.h.bf16 %v1843
        %v1873 = vunpack.c.l.bf16 %v1844
        %v1874 = vunpack.c.h.bf16 %v1844
        %v1875 = vunpack.c.l.bf16 %v1845
        %v1876 = vunpack.c.h.bf16 %v1845
        %v1877 = vunpack.c.l.bf16 %v1846
        %v1878 = vunpack.c.h.bf16 %v1846
        %1879 = vset.pattern.permute.xlu0 6
        %1880 = vperm.xlu0 %1879, %v548
        %v1881 = vpop.permute.xlu0 %1880
        %1883 = vset.pattern.permute.xlu0 6
        %1884 = vperm.xlu0 %1883, %v549
        %v1885 = vpop.permute.xlu0 %1884
        %1887 = vset.pattern.permute.xlu0 6
        %1888 = vperm.xlu0 %1887, %v550
        %v1889 = vpop.permute.xlu0 %1888
        %1891 = vset.pattern.permute.xlu0 6
        %1892 = vperm.xlu0 %1891, %v551
        %v1893 = vpop.permute.xlu0 %1892
        %1895 = vset.pattern.permute.xlu0 6
        %1896 = vperm.xlu0 %1895, %v552
        %v1897 = vpop.permute.xlu0 %1896
        %1899 = vset.pattern.permute.xlu0 6
        %1900 = vperm.xlu0 %1899, %v553
        %v1901 = vpop.permute.xlu0 %1900
        %1903 = vset.pattern.permute.xlu0 6
        %1904 = vperm.xlu0 %1903, %v554
        %v1905 = vpop.permute.xlu0 %1904
        %1907 = vset.pattern.permute.xlu0 6
        %1908 = vperm.xlu0 %1907, %v555
        %v1909 = vpop.permute.xlu0 %1908
        %1911 = vset.pattern.permute.xlu0 6
        %1912 = vperm.xlu0 %1911, %v556
        %v1913 = vpop.permute.xlu0 %1912
        %1915 = vset.pattern.permute.xlu0 6
        %1916 = vperm.xlu0 %1915, %v557
        %v1917 = vpop.permute.xlu0 %1916
        %1919 = vset.pattern.permute.xlu0 6
        %1920 = vperm.xlu0 %1919, %v558
        %v1921 = vpop.permute.xlu0 %1920
        %1923 = vset.pattern.permute.xlu0 6
        %1924 = vperm.xlu0 %1923, %v559
        %v1925 = vpop.permute.xlu0 %1924
        %1927 = vset.pattern.permute.xlu0 6
        %1928 = vperm.xlu0 %1927, %v560
        %v1929 = vpop.permute.xlu0 %1928
        %1931 = vset.pattern.permute.xlu0 6
        %1932 = vperm.xlu0 %1931, %v561
        %v1933 = vpop.permute.xlu0 %1932
        %1935 = vset.pattern.permute.xlu0 6
        %1936 = vperm.xlu0 %1935, %v562
        %v1937 = vpop.permute.xlu0 %1936
        %1939 = vset.pattern.permute.xlu0 6
        %1940 = vperm.xlu0 %1939, %v563
        %v1941 = vpop.permute.xlu0 %1940
        %v1943 = vmul.f32 %v1881, %v1847
        %v1944 = vmul.f32 %v1881, %v1848
        %v1945 = vmul.f32 %v1885, %v1849
        %v1946 = vmul.f32 %v1885, %v1850
        %v1947 = vmul.f32 %v1889, %v1851
        %v1948 = vmul.f32 %v1889, %v1852
        %v1949 = vmul.f32 %v1893, %v1853
        %v1950 = vmul.f32 %v1893, %v1854
        %v1951 = vmul.f32 %v1897, %v1855
        %v1952 = vmul.f32 %v1897, %v1856
        %v1953 = vmul.f32 %v1901, %v1857
        %v1954 = vmul.f32 %v1901, %v1858
        %v1955 = vmul.f32 %v1905, %v1859
        %v1956 = vmul.f32 %v1905, %v1860
        %v1957 = vmul.f32 %v1909, %v1861
        %v1958 = vmul.f32 %v1909, %v1862
        %v1959 = vmul.f32 %v1913, %v1863
        %v1960 = vmul.f32 %v1913, %v1864
        %v1961 = vmul.f32 %v1917, %v1865
        %v1962 = vmul.f32 %v1917, %v1866
        %v1963 = vmul.f32 %v1921, %v1867
        %v1964 = vmul.f32 %v1921, %v1868
        %v1965 = vmul.f32 %v1925, %v1869
        %v1966 = vmul.f32 %v1925, %v1870
        %v1967 = vmul.f32 %v1929, %v1871
        %v1968 = vmul.f32 %v1929, %v1872
        %v1969 = vmul.f32 %v1933, %v1873
        %v1970 = vmul.f32 %v1933, %v1874
        %v1971 = vmul.f32 %v1937, %v1875
        %v1972 = vmul.f32 %v1937, %v1876
        %v1973 = vmul.f32 %v1941, %v1877
        %v1974 = vmul.f32 %v1941, %v1878
        %v1975 = vadd.f32 %v1943, %v1945
        %v1976 = vadd.f32 %v1975, %v1947
        %v1977 = vadd.f32 %v1976, %v1949
        %v1978 = vadd.f32 %v1977, %v1951
        %v1979 = vadd.f32 %v1978, %v1953
        %v1980 = vadd.f32 %v1979, %v1955
        %v1981 = vadd.f32 %v1980, %v1957
        %v1982 = vadd.f32 %v1981, %v1959
        %v1983 = vadd.f32 %v1982, %v1961
        %v1984 = vadd.f32 %v1983, %v1963
        %v1985 = vadd.f32 %v1984, %v1965
        %v1986 = vadd.f32 %v1985, %v1967
        %v1987 = vadd.f32 %v1986, %v1969
        %v1988 = vadd.f32 %v1987, %v1971
        %v1989 = vadd.f32 %v1988, %v1973
        %v1990 = vrot.slane %v1989, 4
        %v1991 = vadd.f32 %v1989, %v1990
        %v1992 = vrot.slane %v1991, 2
        %v1993 = vadd.f32 %v1991, %v1992
        %v1994 = vrot.slane %v1993, 1
        %v1995 = vadd.f32 %v1993, %v1994
        %v1996 = vadd.f32 %v1944, %v1946
        %v1997 = vadd.f32 %v1996, %v1948
        %v1998 = vadd.f32 %v1997, %v1950
        %v1999 = vadd.f32 %v1998, %v1952
        %v2000 = vadd.f32 %v1999, %v1954
        %v2001 = vadd.f32 %v2000, %v1956
        %v2002 = vadd.f32 %v2001, %v1958
        %v2003 = vadd.f32 %v2002, %v1960
        %v2004 = vadd.f32 %v2003, %v1962
        %v2005 = vadd.f32 %v2004, %v1964
        %v2006 = vadd.f32 %v2005, %v1966
        %v2007 = vadd.f32 %v2006, %v1968
        %v2008 = vadd.f32 %v2007, %v1970
        %v2009 = vadd.f32 %v2008, %v1972
        %v2010 = vadd.f32 %v2009, %v1974
        %v2011 = vrot.slane %v2010, 4
        %v2012 = vadd.f32 %v2010, %v2011
        %v2013 = vrot.slane %v2012, 2
        %v2014 = vadd.f32 %v2012, %v2013
        %v2015 = vrot.slane %v2014, 1
        %v2016 = vadd.f32 %v2014, %v2015
        %v2019 = vcombine.low %v1995, %v2016
        %v2021 = vunpack.c.l.s4 1966171168
        %v2022 = vunpack.c.0.s8 %v2021
        %v2023 = vlaneseq
        %v2024 = vshrl.u32 %v2023, 7
        %v2025 = vsub.s32 %v2022, %v2024
        %v2026 = vrot.slane %v2019, %v2025
        %v2028 = vunpack.c.l.s4 1966171168
        %v2029 = vunpack.c.0.s8 %v2028
        %v2030 = vlaneseq
        %v2031 = vshrl.u32 %v2030, 7
        %v2032 = vsub.s32 %v2029, %v2031
        %v2033 = vrot.slane %v2026, %v2032
        %s2035 = scalar_lea.vmem %s306, 6 [#allocation2]
        %2036 = vst.msk [vmem:[%s2035] ss:$8 sm:$0x3] %vm787, %v2033
        %2037 = vst.msk [vmem:[%s2035] ss:$8 sm:$0x0] %vm787, %v2033
        %s2038 = scalar_lea.vmem %s334, 896
        %v2039 = vld [vmem:[%s2038] sm:$0xff]
        %v2040 = vld [vmem:[%s2038 + $0x8] sm:$0xff]
        %v2041 = vld [vmem:[%s2038 + $0x10] sm:$0xff]
        %v2042 = vld [vmem:[%s2038 + $0x18] sm:$0xff]
        %v2043 = vld [vmem:[%s2038 + $0x20] sm:$0xff]
        %v2044 = vld [vmem:[%s2038 + $0x28] sm:$0xff]
        %v2045 = vld [vmem:[%s2038 + $0x30] sm:$0xff]
        %v2046 = vld [vmem:[%s2038 + $0x38] sm:$0xff]
        %v2047 = vld [vmem:[%s2038 + $0x40] sm:$0xff]
        %v2048 = vld [vmem:[%s2038 + $0x48] sm:$0xff]
        %v2049 = vld [vmem:[%s2038 + $0x50] sm:$0xff]
        %v2050 = vld [vmem:[%s2038 + $0x58] sm:$0xff]
        %v2051 = vld [vmem:[%s2038 + $0x60] sm:$0xff]
        %v2052 = vld [vmem:[%s2038 + $0x68] sm:$0xff]
        %v2053 = vld [vmem:[%s2038 + $0x70] sm:$0xff]
        %v2054 = vld [vmem:[%s2038 + $0x78] sm:$0xff]
        %v2055 = vunpack.c.l.bf16 %v2039
        %v2056 = vunpack.c.h.bf16 %v2039
        %v2057 = vunpack.c.l.bf16 %v2040
        %v2058 = vunpack.c.h.bf16 %v2040
        %v2059 = vunpack.c.l.bf16 %v2041
        %v2060 = vunpack.c.h.bf16 %v2041
        %v2061 = vunpack.c.l.bf16 %v2042
        %v2062 = vunpack.c.h.bf16 %v2042
        %v2063 = vunpack.c.l.bf16 %v2043
        %v2064 = vunpack.c.h.bf16 %v2043
        %v2065 = vunpack.c.l.bf16 %v2044
        %v2066 = vunpack.c.h.bf16 %v2044
        %v2067 = vunpack.c.l.bf16 %v2045
        %v2068 = vunpack.c.h.bf16 %v2045
        %v2069 = vunpack.c.l.bf16 %v2046
        %v2070 = vunpack.c.h.bf16 %v2046
        %v2071 = vunpack.c.l.bf16 %v2047
        %v2072 = vunpack.c.h.bf16 %v2047
        %v2073 = vunpack.c.l.bf16 %v2048
        %v2074 = vunpack.c.h.bf16 %v2048
        %v2075 = vunpack.c.l.bf16 %v2049
        %v2076 = vunpack.c.h.bf16 %v2049
        %v2077 = vunpack.c.l.bf16 %v2050
        %v2078 = vunpack.c.h.bf16 %v2050
        %v2079 = vunpack.c.l.bf16 %v2051
        %v2080 = vunpack.c.h.bf16 %v2051
        %v2081 = vunpack.c.l.bf16 %v2052
        %v2082 = vunpack.c.h.bf16 %v2052
        %v2083 = vunpack.c.l.bf16 %v2053
        %v2084 = vunpack.c.h.bf16 %v2053
        %v2085 = vunpack.c.l.bf16 %v2054
        %v2086 = vunpack.c.h.bf16 %v2054
        %2087 = vset.pattern.permute.xlu0 7
        %2088 = vperm.xlu0 %2087, %v548
        %v2089 = vpop.permute.xlu0 %2088
        %2091 = vset.pattern.permute.xlu0 7
        %2092 = vperm.xlu0 %2091, %v549
        %v2093 = vpop.permute.xlu0 %2092
        %2095 = vset.pattern.permute.xlu0 7
        %2096 = vperm.xlu0 %2095, %v550
        %v2097 = vpop.permute.xlu0 %2096
        %2099 = vset.pattern.permute.xlu0 7
        %2100 = vperm.xlu0 %2099, %v551
        %v2101 = vpop.permute.xlu0 %2100
        %2103 = vset.pattern.permute.xlu0 7
        %2104 = vperm.xlu0 %2103, %v552
        %v2105 = vpop.permute.xlu0 %2104
        %2107 = vset.pattern.permute.xlu0 7
        %2108 = vperm.xlu0 %2107, %v553
        %v2109 = vpop.permute.xlu0 %2108
        %2111 = vset.pattern.permute.xlu0 7
        %2112 = vperm.xlu0 %2111, %v554
        %v2113 = vpop.permute.xlu0 %2112
        %2115 = vset.pattern.permute.xlu0 7
        %2116 = vperm.xlu0 %2115, %v555
        %v2117 = vpop.permute.xlu0 %2116
        %2119 = vset.pattern.permute.xlu0 7
        %2120 = vperm.xlu0 %2119, %v556
        %v2121 = vpop.permute.xlu0 %2120
        %2123 = vset.pattern.permute.xlu0 7
        %2124 = vperm.xlu0 %2123, %v557
        %v2125 = vpop.permute.xlu0 %2124
        %2127 = vset.pattern.permute.xlu0 7
        %2128 = vperm.xlu0 %2127, %v558
        %v2129 = vpop.permute.xlu0 %2128
        %2131 = vset.pattern.permute.xlu0 7
        %2132 = vperm.xlu0 %2131, %v559
        %v2133 = vpop.permute.xlu0 %2132
        %2135 = vset.pattern.permute.xlu0 7
        %2136 = vperm.xlu0 %2135, %v560
        %v2137 = vpop.permute.xlu0 %2136
        %2139 = vset.pattern.permute.xlu0 7
        %2140 = vperm.xlu0 %2139, %v561
        %v2141 = vpop.permute.xlu0 %2140
        %2143 = vset.pattern.permute.xlu0 7
        %2144 = vperm.xlu0 %2143, %v562
        %v2145 = vpop.permute.xlu0 %2144
        %2147 = vset.pattern.permute.xlu0 7
        %2148 = vperm.xlu0 %2147, %v563
        %v2149 = vpop.permute.xlu0 %2148
        %v2151 = vmul.f32 %v2089, %v2055
        %v2152 = vmul.f32 %v2089, %v2056
        %v2153 = vmul.f32 %v2093, %v2057
        %v2154 = vmul.f32 %v2093, %v2058
        %v2155 = vmul.f32 %v2097, %v2059
        %v2156 = vmul.f32 %v2097, %v2060
        %v2157 = vmul.f32 %v2101, %v2061
        %v2158 = vmul.f32 %v2101, %v2062
        %v2159 = vmul.f32 %v2105, %v2063
        %v2160 = vmul.f32 %v2105, %v2064
        %v2161 = vmul.f32 %v2109, %v2065
        %v2162 = vmul.f32 %v2109, %v2066
        %v2163 = vmul.f32 %v2113, %v2067
        %v2164 = vmul.f32 %v2113, %v2068
        %v2165 = vmul.f32 %v2117, %v2069
        %v2166 = vmul.f32 %v2117, %v2070
        %v2167 = vmul.f32 %v2121, %v2071
        %v2168 = vmul.f32 %v2121, %v2072
        %v2169 = vmul.f32 %v2125, %v2073
        %v2170 = vmul.f32 %v2125, %v2074
        %v2171 = vmul.f32 %v2129, %v2075
        %v2172 = vmul.f32 %v2129, %v2076
        %v2173 = vmul.f32 %v2133, %v2077
        %v2174 = vmul.f32 %v2133, %v2078
        %v2175 = vmul.f32 %v2137, %v2079
        %v2176 = vmul.f32 %v2137, %v2080
        %v2177 = vmul.f32 %v2141, %v2081
        %v2178 = vmul.f32 %v2141, %v2082
        %v2179 = vmul.f32 %v2145, %v2083
        %v2180 = vmul.f32 %v2145, %v2084
        %v2181 = vmul.f32 %v2149, %v2085
        %v2182 = vmul.f32 %v2149, %v2086
        %v2183 = vadd.f32 %v2151, %v2153
        %v2184 = vadd.f32 %v2183, %v2155
        %v2185 = vadd.f32 %v2184, %v2157
        %v2186 = vadd.f32 %v2185, %v2159
        %v2187 = vadd.f32 %v2186, %v2161
        %v2188 = vadd.f32 %v2187, %v2163
        %v2189 = vadd.f32 %v2188, %v2165
        %v2190 = vadd.f32 %v2189, %v2167
        %v2191 = vadd.f32 %v2190, %v2169
        %v2192 = vadd.f32 %v2191, %v2171
        %v2193 = vadd.f32 %v2192, %v2173
        %v2194 = vadd.f32 %v2193, %v2175
        %v2195 = vadd.f32 %v2194, %v2177
        %v2196 = vadd.f32 %v2195, %v2179
        %v2197 = vadd.f32 %v2196, %v2181
        %v2198 = vrot.slane %v2197, 4
        %v2199 = vadd.f32 %v2197, %v2198
        %v2200 = vrot.slane %v2199, 2
        %v2201 = vadd.f32 %v2199, %v2200
        %v2202 = vrot.slane %v2201, 1
        %v2203 = vadd.f32 %v2201, %v2202
        %v2204 = vadd.f32 %v2152, %v2154
        %v2205 = vadd.f32 %v2204, %v2156
        %v2206 = vadd.f32 %v2205, %v2158
        %v2207 = vadd.f32 %v2206, %v2160
        %v2208 = vadd.f32 %v2207, %v2162
        %v2209 = vadd.f32 %v2208, %v2164
        %v2210 = vadd.f32 %v2209, %v2166
        %v2211 = vadd.f32 %v2210, %v2168
        %v2212 = vadd.f32 %v2211, %v2170
        %v2213 = vadd.f32 %v2212, %v2172
        %v2214 = vadd.f32 %v2213, %v2174
        %v2215 = vadd.f32 %v2214, %v2176
        %v2216 = vadd.f32 %v2215, %v2178
        %v2217 = vadd.f32 %v2216, %v2180
        %v2218 = vadd.f32 %v2217, %v2182
        %v2219 = vrot.slane %v2218, 4
        %v2220 = vadd.f32 %v2218, %v2219
        %v2221 = vrot.slane %v2220, 2
        %v2222 = vadd.f32 %v2220, %v2221
        %v2223 = vrot.slane %v2222, 1
        %v2224 = vadd.f32 %v2222, %v2223
        %v2227 = vcombine.low %v2203, %v2224
        %v2229 = vunpack.c.l.s4 1966171168
        %v2230 = vunpack.c.0.s8 %v2229
        %v2231 = vlaneseq
        %v2232 = vshrl.u32 %v2231, 7
        %v2233 = vsub.s32 %v2230, %v2232
        %v2234 = vrot.slane %v2227, %v2233
        %v2236 = vunpack.c.l.s4 1966171168
        %v2237 = vunpack.c.0.s8 %v2236
        %v2238 = vlaneseq
        %v2239 = vshrl.u32 %v2238, 7
        %v2240 = vsub.s32 %v2237, %v2239
        %v2241 = vrot.slane %v2234, %v2240
        %s2243 = scalar_lea.vmem %s306, 7 [#allocation2]
        %2244 = vst.msk [vmem:[%s2243] ss:$8 sm:$0x3] %vm787, %v2241
        %2245 = vst.msk [vmem:[%s2243] ss:$8 sm:$0x0] %vm787, %v2241
        %s2246 = sand.u32 %s153, 1
        %s2247 = scalar_lea.sflag [#allocation3], %s2246
        %s2248 = sand.u32 %s153, 1
        %s2249 = smul.addr %s2248, 16
        %s2250 = scalar_lea.vmem [#allocation2], %s2249
        %s2251 = sand.u32 %s179, 1
        %s2252 = scalar_lea.sflag [#allocation5], %s2251
        %s2253 = sand.u32 %s179, 1
        %s2254 = smul.addr %s2253, 8
        %s2255 = scalar_lea.vmem [#allocation4], %s2254
        %p2256 = scmp.lt.s32.totalorder %s25, 1
        %s2257 = scalar_select %p2256, %s25, 1
        %s2258 = smul.addr %s2257, 8
        %s2259 = scalar_lea.vmem %s7, %s2258
        // Predicated region
        $region41: #{mas_interface_forward.1} parent=39 // pred_check
          %p2260 = pneg %p163
        $region42: #{mas_interface_forward.1} parent=39 // pred_check_branch
          %2262 = sbr.rel (%p2260) target = $region44
        $region43: #{mas_interface_forward.1} parent=39 // pred_region
          %s2264 = ssub.s32 256, 256
          %2265 = vsyncadd %s2247, %s2264
          %s2266 = smul.addr %s25, 2
          %s2267 = smul.addr %s2266, 128
          %s2268 = scalar_lea.hbm %s5, %s2267
          %s2270 = sshll.u32 %s2250, 4
          %s2271 = int_to_ptr.vmem [resolvable:$true] %s2270
          %2273 = dma.vmem_to_hbm [thread:$0]  %s2271, 256, %s2268, %s2247
        $region44: #{mas_interface_forward.1} parent=39 // pred_fallthru
          _
        // Predicated region
        $region45: #{mas_interface_forward.1} parent=39 // pred_check
          %p2274 = pneg %p189
        $region46: #{mas_interface_forward.1} parent=39 // pred_check_branch
          %2276 = sbr.rel (%p2274) target = $region48
        $region47: #{mas_interface_forward.1} parent=39 // pred_region
          %s2278 = ssub.s32 128, 128
          %2279 = vsyncadd %s2252, %s2278
          %s2280 = smul.addr %s25, 128
          %s2281 = scalar_lea.hbm %s6, %s2280
          %s2283 = sshll.u32 %s2255, 4
          %s2284 = int_to_ptr.vmem [resolvable:$true] %s2283
          %2286 = dma.vmem_to_hbm [thread:$0]  %s2284, 128, %s2281, %s2252
        $region48: #{mas_interface_forward.1} parent=39 // pred_fallthru
          _
        // Predicated region
        $region49: #{mas_interface_forward.1} parent=39 // pred_check
          %p2287 = pneg %p215
        $region50: #{mas_interface_forward.1} parent=39 // pred_check_branch
          %2289 = sbr.rel (%p2287) target = $region52
        $region51: #{mas_interface_forward.1} parent=39 // pred_region
          _
        $region52: #{mas_interface_forward.1} parent=39 // pred_fallthru
          _
      $region40: #{mas_interface_forward.1} parent=5 // pred_fallthru
        _
      %p2290 = scmp.le.s32.totalorder 2, %s20
      // Predicated region
      $region53: #{mas_interface_forward.1} parent=5 // pred_check
        %p2291 = pneg %p2290
      $region54: #{mas_interface_forward.1} parent=5 // pred_check_branch
        %2293 = sbr.rel (%p2291) target = $region56
      $region55: #{mas_interface_forward.1} parent=5 // pred_region
        %s2294 = ssub.s32 %s20, 2
        // Predicated region
        $region57: #{mas_interface_forward.1} parent=55 // pred_check
          %p2295 = pneg %p169
        $region58: #{mas_interface_forward.1} parent=55 // pred_check_branch
          %2297 = sbr.rel (%p2295) target = $region60
        $region59: #{mas_interface_forward.1} parent=55 // pred_region
          %s2298 = sand.u32 %s154, 1
          %s2299 = scalar_lea.sflag [#allocation3], %s2298
          %s2300 = sand.u32 %s154, 1
          %s2301 = smul.addr %s2300, 16
          %s2302 = scalar_lea.vmem [#allocation2], %s2301
          %2303 = dma.done %s2299, 256
        $region60: #{mas_interface_forward.1} parent=55 // pred_fallthru
          _
        // Predicated region
        $region61: #{mas_interface_forward.1} parent=55 // pred_check
          %p2304 = pneg %p195
        $region62: #{mas_interface_forward.1} parent=55 // pred_check_branch
          %2306 = sbr.rel (%p2304) target = $region64
        $region63: #{mas_interface_forward.1} parent=55 // pred_region
          %s2307 = sand.u32 %s180, 1
          %s2308 = scalar_lea.sflag [#allocation5], %s2307
          %s2309 = sand.u32 %s180, 1
          %s2310 = smul.addr %s2309, 8
          %s2311 = scalar_lea.vmem [#allocation4], %s2310
          %2312 = dma.done %s2308, 128
        $region64: #{mas_interface_forward.1} parent=55 // pred_fallthru
          _
        // Predicated region
        $region65: #{mas_interface_forward.1} parent=55 // pred_check
          %p2313 = pneg %p221
        $region66: #{mas_interface_forward.1} parent=55 // pred_check_branch
          %2315 = sbr.rel (%p2313) target = $region68
        $region67: #{mas_interface_forward.1} parent=55 // pred_region
          %p2316 = scmp.lt.s32.totalorder %s26, 1
          %s2317 = scalar_select %p2316, %s26, 1
          %s2318 = smul.addr %s2317, 8
          %s2319 = scalar_lea.vmem %s7, %s2318
        $region68: #{mas_interface_forward.1} parent=55 // pred_fallthru
          _
      $region56: #{mas_interface_forward.1} parent=5 // pred_fallthru
        _
    $region6: #{mas_interface_forward.1} parent=1 // loop_footer
      %s24 = sadd.s32 1, %s20
    $region7: #{mas_interface_forward.1} parent=1 // loop_footer_branch
      %19 = sbr.rel target = $region3
    $region8: #{mas_interface_forward.1} parent=1 // loop_exit
      _
    %2320 = vsyncpa [#allocation3], 1
    %s2321 = scalar_lea.sflag [#allocation3], 1
    %2322 = vsyncpa %s2321, 1
    %2323 = vsyncpa [#allocation5], 1
    %s2324 = scalar_lea.sflag [#allocation5], 1
    %2325 = vsyncpa %s2324, 1

</llo_original>
